<compile_context>
chip_gen: v7x
topology: tpu7x:2x2x1
jax: 0.10.0
libtpu: 0.0.40
codegen_flags: <defaults>
</compile_context>

<pallas_src>
import functools

import jax
import jax.numpy as jnp
import numpy as np
from jax.experimental import pallas as pl
from jax.experimental.pallas import tpu as pltpu


# ----------------------------------------------------------------------------
# Kernel: one grid step = one (direction, batch element) pair.
# ----------------------------------------------------------------------------
def cross_attn_kernel(q_ref, kv_ref,
                      wq_ref, wk_ref, wv_ref,
                      bq_ref, bk_ref, bv_ref,
                      wo_ref, bo_ref,
                      wgq_ref, wga_ref, bg_ref,
                      fused_ref, attn_ref,
                      *, num_heads, seq, dim, valid_k_dir0, valid_k_dir1):
    H, T, D = num_heads, seq, dim
    hd = D // H
    scale = 1.0 / float(hd) ** 0.5

    q = q_ref[...]          # (T, D) bf16 (padded query-side features)
    kv = kv_ref[...]        # (T, D) bf16 (padded key/value-side features)

    # Fused, lane-dense projections: full-D-wide MXU matmuls, f32 accumulate,
    # bias add in f32, then ONE cast to bf16 for all downstream matmuls.
    Q = (jnp.dot(q, wq_ref[...], preferred_element_type=jnp.float32)
         + bq_ref[...]).astype(jnp.bfloat16)                      # (T, D)
    K = (jnp.dot(kv, wk_ref[...], preferred_element_type=jnp.float32)
         + bk_ref[...]).astype(jnp.bfloat16)                      # (T, D)
    V = (jnp.dot(kv, wv_ref[...], preferred_element_type=jnp.float32)
         + bv_ref[...]).astype(jnp.bfloat16)                      # (T, D)

    # In-kernel key mask (replaces the HBM (M, M) f32 mask of v1).
    # Direction 0: audio keys (valid_k_dir0), direction 1: video keys.
    direction = pl.program_id(0)
    valid_k = jnp.where(direction == 0, valid_k_dir0, valid_k_dir1)
    col = jax.lax.broadcasted_iota(jnp.int32, (T, T), 1)
    key_ok = col < valid_k                                        # (T, T) bool

    # Per-head attention (QK^T / PV are inherently K=hd matmuls); heads are
    # carved out with static lane slices, contexts re-joined with one concat.
    dn = (((1,), (1,)), ((), ()))                                 # 'qd,kd->qk'
    attn_sum = jnp.zeros((T, T), jnp.float32)
    ctx_heads = []
    for h in range(H):
        lo, hi = h * hd, (h + 1) * hd
        Qh, Kh, Vh = Q[:, lo:hi], K[:, lo:hi], V[:, lo:hi]        # (T, hd) bf16
        s = jax.lax.dot_general(Qh, Kh, dn,
                                preferred_element_type=jnp.float32) * scale
        s = jnp.where(key_ok, s, -1e30)
        s = s - jnp.max(s, axis=-1, keepdims=True)
        e = jnp.exp(s)                                            # f32 (EUP)
        # Exact normalization: returned attention weights must sum to 1.
        p = e / jnp.sum(e, axis=-1, keepdims=True)                # (T, T) f32
        attn_sum = attn_sum + p
        ctx_heads.append(jnp.dot(p.astype(jnp.bfloat16), Vh,
                                 preferred_element_type=jnp.float32)
                         .astype(jnp.bfloat16))                   # (T, hd)

    # Head-averaged attention weights (PyTorch average_attn_weights=True).
    attn_ref[...] = (attn_sum * (1.0 / H)).astype(attn_ref.dtype)

    # Head concat (single relayout) + ONE lane-dense K=D out-projection.
    ctx = jnp.concatenate(ctx_heads, axis=-1)                     # (T, D) bf16
    aligned = (jnp.dot(ctx, wo_ref[...], preferred_element_type=jnp.float32)
               + bo_ref[...])                                     # (T, D) f32

    # Gate: tanh([q ; aligned] @ Wg + bg) with Wg split into its two halves.
    g = (jnp.dot(q, wgq_ref[...], preferred_element_type=jnp.float32)
         + jnp.dot(aligned.astype(jnp.bfloat16), wga_ref[...],
                   preferred_element_type=jnp.float32)
         + bg_ref[...])
    fused_ref[...] = jnp.tanh(g).astype(fused_ref.dtype)


# ----------------------------------------------------------------------------
# Wrapper: pads/stacks both directions and runs a single fused pallas_call
# with grid = (direction, batch).
# ----------------------------------------------------------------------------
@functools.partial(jax.jit, static_argnames=("num_heads",))
def temporal_cross_alignment(video, audio, mha_va, mha_av, gate, *, num_heads):
    B, Tv, D = video.shape
    Ta = audio.shape[1]
    T = max(Tv, Ta)
    H = num_heads

    def pad_t(x):
        return jnp.pad(x, ((0, 0), (0, T - x.shape[1]), (0, 0)))

    # Direction 0: video queries / audio keys.  Direction 1: the reverse.
    q_st = jnp.stack([pad_t(video), pad_t(audio)]).astype(jnp.bfloat16)   # (2,B,T,D)
    kv_st = jnp.stack([pad_t(audio), pad_t(video)]).astype(jnp.bfloat16)  # (2,B,T,D)

    def stack2(key, dtype):
        return jnp.stack([mha_va[key], mha_av[key]]).astype(dtype)

    wq = stack2("wq", jnp.bfloat16)      # (2, D, D)
    wk = stack2("wk", jnp.bfloat16)
    wv = stack2("wv", jnp.bfloat16)
    wo = stack2("wo", jnp.bfloat16)
    bq = stack2("bq", jnp.float32)       # (2, 1, D)
    bk = stack2("bk", jnp.float32)
    bv = stack2("bv", jnp.float32)
    bo = stack2("bo", jnp.float32)
    wgq = gate["wg_q"].astype(jnp.bfloat16)   # (D, D)  shared gate halves
    wga = gate["wg_a"].astype(jnp.bfloat16)   # (D, D)
    bg = gate["bg"].astype(jnp.float32)       # (1, D)

    kernel = functools.partial(cross_attn_kernel,
                               num_heads=H, seq=T, dim=D,
                               valid_k_dir0=Ta, valid_k_dir1=Tv)

    in_specs = [
        pl.BlockSpec((None, None, T, D), lambda d, b: (d, b, 0, 0)),  # q
        pl.BlockSpec((None, None, T, D), lambda d, b: (d, b, 0, 0)),  # kv
        pl.BlockSpec((None, D, D), lambda d, b: (d, 0, 0)),           # wq
        pl.BlockSpec((None, D, D), lambda d, b: (d, 0, 0)),           # wk
        pl.BlockSpec((None, D, D), lambda d, b: (d, 0, 0)),           # wv
        pl.BlockSpec((None, 1, D), lambda d, b: (d, 0, 0)),           # bq
        pl.BlockSpec((None, 1, D), lambda d, b: (d, 0, 0)),           # bk
        pl.BlockSpec((None, 1, D), lambda d, b: (d, 0, 0)),           # bv
        pl.BlockSpec((None, D, D), lambda d, b: (d, 0, 0)),           # wo
        pl.BlockSpec((None, 1, D), lambda d, b: (d, 0, 0)),           # bo
        pl.BlockSpec((D, D), lambda d, b: (0, 0)),                    # wg_q (shared)
        pl.BlockSpec((D, D), lambda d, b: (0, 0)),                    # wg_a (shared)
        pl.BlockSpec((1, D), lambda d, b: (0, 0)),                    # bg   (shared)
    ]
    out_specs = (
        pl.BlockSpec((None, None, T, D), lambda d, b: (d, b, 0, 0)),  # fused
        pl.BlockSpec((None, None, T, T), lambda d, b: (d, b, 0, 0)),  # attn
    )

    # TODO(synk): for production sequence lengths, tile the key axis flash-style
    # (extra grid axis + online softmax) so the (T, T) f32 scores never exceed
    # v7x's 64 MiB VMEM; at these module-scale shapes a single key block is fine.
    fused, attn = pl.pallas_call(
        kernel,
        out_shape=(jax.ShapeDtypeStruct((2, B, T, D), jnp.float32),
                   jax.ShapeDtypeStruct((2, B, T, T), jnp.float32)),
        grid=(2, B),
        in_specs=in_specs,
        out_specs=out_specs,
        compiler_params=pltpu.CompilerParams(
            dimension_semantics=("parallel", "parallel"),
            vmem_limit_bytes=48 * 1024 * 1024),
    )(q_st, kv_st, wq, wk, wv, bq, bk, bv, wo, bo, wgq, wga, bg)

    fused_video = fused[0, :, :Tv, :]
    fused_audio = fused[1, :, :Ta, :]
    video_attention = attn[0, :, :Tv, :Ta]
    audio_attention = attn[1, :, :Ta, :Tv]
    return fused_video, fused_audio, video_attention, audio_attention


# ----------------------------------------------------------------------------
# Parameter init (deterministic; PyTorch layout, pre-transposed for x @ W)
# ----------------------------------------------------------------------------
def init_mha_params(key, D):
    k1, k2, k3, k4 = jax.random.split(key, 4)
    in_proj_w = jax.random.normal(k1, (3 * D, D), jnp.float32) * 0.05   # (3D, D)
    in_proj_b = jax.random.normal(k2, (3 * D,), jnp.float32) * 0.05
    out_w = jax.random.normal(k3, (D, D), jnp.float32) * 0.05           # (D, D)
    out_b = jax.random.normal(k4, (D,), jnp.float32) * 0.05
    return {
        "wq": in_proj_w[:D].T, "wk": in_proj_w[D:2 * D].T, "wv": in_proj_w[2 * D:].T,
        "bq": in_proj_b[:D].reshape(1, D),
        "bk": in_proj_b[D:2 * D].reshape(1, D),
        "bv": in_proj_b[2 * D:].reshape(1, D),
        "wo": out_w.T, "bo": out_b.reshape(1, D),
    }


def init_gate_params(key, D):
    k1, k2 = jax.random.split(key, 2)
    wg = jax.random.normal(k1, (D, 2 * D), jnp.float32) * 0.05          # (out=D, in=2D)
    bg = jax.random.normal(k2, (D,), jnp.float32) * 0.05
    wg_t = wg.T                                                         # (2D, D)
    return {"wg_q": wg_t[:D], "wg_a": wg_t[D:], "bg": bg.reshape(1, D)}


# ----------------------------------------------------------------------------
# Pure-JAX f32 reference (torch.nn.MultiheadAttention semantics) for checking
# ----------------------------------------------------------------------------
def mha_ref(q, kv, p, num_heads):
    B, Tq, D = q.shape
    Tk = kv.shape[1]
    hd = D // num_heads
    Q = q @ p["wq"] + p["bq"]
    K = kv @ p["wk"] + p["bk"]
    V = kv @ p["wv"] + p["bv"]
    Qh = Q.reshape(B, Tq, num_heads, hd).transpose(0, 2, 1, 3)
    Kh = K.reshape(B, Tk, num_heads, hd).transpose(0, 2, 1, 3)
    Vh = V.reshape(B, Tk, num_heads, hd).transpose(0, 2, 1, 3)
    s = jnp.einsum("bhqd,bhkd->bhqk", Qh, Kh) / jnp.sqrt(jnp.float32(hd))
    a = jax.nn.softmax(s, axis=-1)
    o = jnp.einsum("bhqk,bhkd->bhqd", a, Vh).transpose(0, 2, 1, 3).reshape(B, Tq, D)
    o = o @ p["wo"] + p["bo"]
    return o, a.mean(axis=1)


def module_ref(video, audio, mha_va, mha_av, gate, num_heads):
    v_al, v_attn = mha_ref(video, audio, mha_va, num_heads)
    a_al, a_attn = mha_ref(audio, video, mha_av, num_heads)
    fv = jnp.tanh(video @ gate["wg_q"] + v_al @ gate["wg_a"] + gate["bg"])
    fa = jnp.tanh(audio @ gate["wg_q"] + a_al @ gate["wg_a"] + gate["bg"])
    return fv, fa, v_attn, a_attn


# ----------------------------------------------------------------------------
if __name__ == "__main__":
    # Small shapes consistent with the module (feature_dim divisible by heads)
    B, Tv, Ta, D, H = 2, 8, 16, 32, 4

    root = jax.random.PRNGKey(0)
    k_v, k_a, k_m1, k_m2, k_g = jax.random.split(root, 5)
    video = jax.random.normal(k_v, (B, Tv, D), jnp.float32)
    audio = jax.random.normal(k_a, (B, Ta, D), jnp.float32)

    mha_va = init_mha_params(k_m1, D)   # video_to_audio_attention
    mha_av = init_mha_params(k_m2, D)   # audio_to_video_attention
    gate = init_gate_params(k_g, D)     # shared gate Linear(2D, D)

    outs = temporal_cross_alignment(video, audio, mha_va, mha_av, gate,
                                    num_heads=H)
    outs = jax.block_until_ready(outs)

    refs = module_ref(video, audio, mha_va, mha_av, gate, H)
    # Tolerance loosened vs an f32-only version because MXU matmuls run on
    # bf16 inputs (f32 accumulation) -- numerics, not semantics.
    for got, ref in zip(outs, refs):
        np.testing.assert_allclose(np.asarray(got), np.asarray(ref),
                                   rtol=2e-2, atol=2e-2)

    print("KERNEL_OK")
</pallas_src>

<mosaic_0001>
module attributes {stable_mosaic.version = 11 : i64} {
  func.func @cross_attn_kernel(%arg0: i32, %arg1: i32, %arg2: memref<1x1x16x32xbf16, #tpu.memory_space<vmem>>, %arg3: memref<1x1x16x32xbf16, #tpu.memory_space<vmem>>, %arg4: memref<1x32x32xbf16, #tpu.memory_space<vmem>>, %arg5: memref<1x32x32xbf16, #tpu.memory_space<vmem>>, %arg6: memref<1x32x32xbf16, #tpu.memory_space<vmem>>, %arg7: memref<1x1x32xf32, #tpu.memory_space<vmem>>, %arg8: memref<1x1x32xf32, #tpu.memory_space<vmem>>, %arg9: memref<1x1x32xf32, #tpu.memory_space<vmem>>, %arg10: memref<1x32x32xbf16, #tpu.memory_space<vmem>>, %arg11: memref<1x1x32xf32, #tpu.memory_space<vmem>>, %arg12: memref<32x32xbf16, #tpu.memory_space<vmem>>, %arg13: memref<32x32xbf16, #tpu.memory_space<vmem>>, %arg14: memref<1x32xf32, #tpu.memory_space<vmem>>, %arg15: memref<1x1x16x32xf32, #tpu.memory_space<vmem>>, %arg16: memref<1x1x16x16xf32, #tpu.memory_space<vmem>>) attributes {dimension_semantics = [#tpu.dimension_semantics<parallel>, #tpu.dimension_semantics<parallel>], iteration_bounds = array<i64: 2, 2>, scalar_prefetch = 0 : i64, scratch_operands = 0 : i64, tpu.core_type = #tpu.core_type<tc>, window_params = [{transform_indices = @transform_0, window_bounds = array<i64: 1, 1, 16, 32>}, {transform_indices = @transform_1, window_bounds = array<i64: 1, 1, 16, 32>}, {transform_indices = @transform_2, window_bounds = array<i64: 1, 32, 32>}, {transform_indices = @transform_3, window_bounds = array<i64: 1, 32, 32>}, {transform_indices = @transform_4, window_bounds = array<i64: 1, 32, 32>}, {transform_indices = @transform_5, window_bounds = array<i64: 1, 1, 32>}, {transform_indices = @transform_6, window_bounds = array<i64: 1, 1, 32>}, {transform_indices = @transform_7, window_bounds = array<i64: 1, 1, 32>}, {transform_indices = @transform_8, window_bounds = array<i64: 1, 32, 32>}, {transform_indices = @transform_9, window_bounds = array<i64: 1, 1, 32>}, {pipeline_mode = #tpu.pipeline_mode<synchronous>, transform_indices = @transform_10, window_bounds = array<i64: 32, 32>}, {pipeline_mode = #tpu.pipeline_mode<synchronous>, transform_indices = @transform_11, window_bounds = array<i64: 32, 32>}, {pipeline_mode = #tpu.pipeline_mode<synchronous>, transform_indices = @transform_12, window_bounds = array<i64: 1, 32>}, {transform_indices = @transform_13, window_bounds = array<i64: 1, 1, 16, 32>}, {transform_indices = @transform_14, window_bounds = array<i64: 1, 1, 16, 16>}]} {
    %c0 = arith.constant 0 : index
    %c0_0 = arith.constant 0 : index
    %c0_1 = arith.constant 0 : index
    %c0_2 = arith.constant 0 : index
    %0 = vector.load %arg2[%c0, %c0_0, %c0_1, %c0_2] : memref<1x1x16x32xbf16, #tpu.memory_space<vmem>>, vector<1x1x16x32xbf16>
    %1 = vector.shape_cast %0 : vector<1x1x16x32xbf16> to vector<16x32xbf16>
    %c0_3 = arith.constant 0 : index
    %c0_4 = arith.constant 0 : index
    %c0_5 = arith.constant 0 : index
    %c0_6 = arith.constant 0 : index
    %2 = vector.load %arg3[%c0_3, %c0_4, %c0_5, %c0_6] : memref<1x1x16x32xbf16, #tpu.memory_space<vmem>>, vector<1x1x16x32xbf16>
    %3 = vector.shape_cast %2 : vector<1x1x16x32xbf16> to vector<16x32xbf16>
    %c0_7 = arith.constant 0 : index
    %c0_8 = arith.constant 0 : index
    %c0_9 = arith.constant 0 : index
    %4 = vector.load %arg4[%c0_7, %c0_8, %c0_9] : memref<1x32x32xbf16, #tpu.memory_space<vmem>>, vector<1x32x32xbf16>
    %5 = vector.shape_cast %4 : vector<1x32x32xbf16> to vector<32x32xbf16>
    %cst = arith.constant dense<0.000000e+00> : vector<16x32xf32>
    %6 = tpu.matmul %1, %5, %cst {dimension_numbers = #tpu.dot_dimension_numbers<[1], [0], [0], [1], [0, 0, 1, 1], [], []>} : vector<16x32xbf16>, vector<32x32xbf16>, vector<16x32xf32> -> vector<16x32xf32>
    %c0_10 = arith.constant 0 : index
    %c0_11 = arith.constant 0 : index
    %c0_12 = arith.constant 0 : index
    %7 = vector.load %arg7[%c0_10, %c0_11, %c0_12] : memref<1x1x32xf32, #tpu.memory_space<vmem>>, vector<1x1x32xf32>
    %8 = vector.shape_cast %7 : vector<1x1x32xf32> to vector<1x32xf32>
    %9 = vector.broadcast %8 : vector<1x32xf32> to vector<16x32xf32>
    %10 = arith.addf %6, %9 : vector<16x32xf32>
    %11 = arith.truncf %10 : vector<16x32xf32> to vector<16x32xbf16>
    %c0_13 = arith.constant 0 : index
    %c0_14 = arith.constant 0 : index
    %c0_15 = arith.constant 0 : index
    %12 = vector.load %arg5[%c0_13, %c0_14, %c0_15] : memref<1x32x32xbf16, #tpu.memory_space<vmem>>, vector<1x32x32xbf16>
    %13 = vector.shape_cast %12 : vector<1x32x32xbf16> to vector<32x32xbf16>
    %cst_16 = arith.constant dense<0.000000e+00> : vector<16x32xf32>
    %14 = tpu.matmul %3, %13, %cst_16 {dimension_numbers = #tpu.dot_dimension_numbers<[1], [0], [0], [1], [0, 0, 1, 1], [], []>} : vector<16x32xbf16>, vector<32x32xbf16>, vector<16x32xf32> -> vector<16x32xf32>
    %c0_17 = arith.constant 0 : index
    %c0_18 = arith.constant 0 : index
    %c0_19 = arith.constant 0 : index
    %15 = vector.load %arg8[%c0_17, %c0_18, %c0_19] : memref<1x1x32xf32, #tpu.memory_space<vmem>>, vector<1x1x32xf32>
    %16 = vector.shape_cast %15 : vector<1x1x32xf32> to vector<1x32xf32>
    %17 = vector.broadcast %16 : vector<1x32xf32> to vector<16x32xf32>
    %18 = arith.addf %14, %17 : vector<16x32xf32>
    %19 = arith.truncf %18 : vector<16x32xf32> to vector<16x32xbf16>
    %c0_20 = arith.constant 0 : index
    %c0_21 = arith.constant 0 : index
    %c0_22 = arith.constant 0 : index
    %20 = vector.load %arg6[%c0_20, %c0_21, %c0_22] : memref<1x32x32xbf16, #tpu.memory_space<vmem>>, vector<1x32x32xbf16>
    %21 = vector.shape_cast %20 : vector<1x32x32xbf16> to vector<32x32xbf16>
    %cst_23 = arith.constant dense<0.000000e+00> : vector<16x32xf32>
    %22 = tpu.matmul %3, %21, %cst_23 {dimension_numbers = #tpu.dot_dimension_numbers<[1], [0], [0], [1], [0, 0, 1, 1], [], []>} : vector<16x32xbf16>, vector<32x32xbf16>, vector<16x32xf32> -> vector<16x32xf32>
    %c0_24 = arith.constant 0 : index
    %c0_25 = arith.constant 0 : index
    %c0_26 = arith.constant 0 : index
    %23 = vector.load %arg9[%c0_24, %c0_25, %c0_26] : memref<1x1x32xf32, #tpu.memory_space<vmem>>, vector<1x1x32xf32>
    %24 = vector.shape_cast %23 : vector<1x1x32xf32> to vector<1x32xf32>
    %25 = vector.broadcast %24 : vector<1x32xf32> to vector<16x32xf32>
    %26 = arith.addf %22, %25 : vector<16x32xf32>
    %27 = arith.truncf %26 : vector<16x32xf32> to vector<16x32xbf16>
    %c0_i32 = arith.constant 0 : i32
    %28 = arith.cmpi eq, %arg0, %c0_i32 : i32
    %c16_i32 = arith.constant 16 : i32
    %c8_i32 = arith.constant 8 : i32
    %29 = arith.select %28, %c16_i32, %c8_i32 : i32
    %30 = tpu.iota {dimensions = array<i32: 1>} : vector<16x16xi32>
    %31 = vector.broadcast %29 : i32 to vector<16x16xi32>
    %32 = arith.cmpi slt, %30, %31 : vector<16x16xi32>
    %cst_27 = arith.constant 0.000000e+00 : f32
    %33 = vector.broadcast %cst_27 : f32 to vector<16x16xf32>
    %34 = vector.extract_strided_slice %11 {offsets = [0, 0], sizes = [16, 8], strides = [1, 1]} : vector<16x32xbf16> to vector<16x8xbf16>
    %35 = vector.extract_strided_slice %19 {offsets = [0, 0], sizes = [16, 8], strides = [1, 1]} : vector<16x32xbf16> to vector<16x8xbf16>
    %36 = vector.extract_strided_slice %27 {offsets = [0, 0], sizes = [16, 8], strides = [1, 1]} : vector<16x32xbf16> to vector<16x8xbf16>
    %cst_28 = arith.constant dense<0.000000e+00> : vector<16x16xf32>
    %37 = tpu.matmul %34, %35, %cst_28 {dimension_numbers = #tpu.dot_dimension_numbers<[1], [1], [0], [0], [0, 0, 1, 0], [], []>} : vector<16x8xbf16>, vector<16x8xbf16>, vector<16x16xf32> -> vector<16x16xf32>
    %cst_29 = arith.constant 0.353553385 : f32
    %38 = vector.broadcast %cst_29 : f32 to vector<16x16xf32>
    %39 = arith.mulf %37, %38 : vector<16x16xf32>
    %cst_30 = arith.constant -1.000000e+30 : f32
    %40 = vector.broadcast %cst_30 : f32 to vector<16x16xf32>
    %41 = arith.select %32, %39, %40 : vector<16x16xi1>, vector<16x16xf32>
    %cst_31 = arith.constant dense<0xFF800000> : vector<16xf32>
    %42 = vector.multi_reduction <maximumf>, %41, %cst_31 [1] : vector<16x16xf32> to vector<16xf32>
    %43 = vector.shape_cast %42 : vector<16xf32> to vector<16x1xf32>
    %44 = vector.broadcast %43 : vector<16x1xf32> to vector<16x16xf32>
    %45 = arith.subf %41, %44 : vector<16x16xf32>
    %46 = math.exp %45 : vector<16x16xf32>
    %cst_32 = arith.constant dense<0.000000e+00> : vector<16xf32>
    %47 = vector.multi_reduction <add>, %46, %cst_32 [1] : vector<16x16xf32> to vector<16xf32>
    %48 = vector.shape_cast %47 : vector<16xf32> to vector<16x1xf32>
    %49 = vector.broadcast %48 : vector<16x1xf32> to vector<16x16xf32>
    %50 = arith.divf %46, %49 : vector<16x16xf32>
    %51 = arith.addf %33, %50 : vector<16x16xf32>
    %52 = arith.truncf %50 : vector<16x16xf32> to vector<16x16xbf16>
    %cst_33 = arith.constant dense<0.000000e+00> : vector<16x8xf32>
    %53 = tpu.matmul %52, %36, %cst_33 {dimension_numbers = #tpu.dot_dimension_numbers<[1], [0], [0], [1], [0, 0, 1, 1], [], []>} : vector<16x16xbf16>, vector<16x8xbf16>, vector<16x8xf32> -> vector<16x8xf32>
    %54 = arith.truncf %53 : vector<16x8xf32> to vector<16x8xbf16>
    %55 = vector.extract_strided_slice %11 {offsets = [0, 8], sizes = [16, 8], strides = [1, 1]} : vector<16x32xbf16> to vector<16x8xbf16>
    %56 = vector.extract_strided_slice %19 {offsets = [0, 8], sizes = [16, 8], strides = [1, 1]} : vector<16x32xbf16> to vector<16x8xbf16>
    %57 = vector.extract_strided_slice %27 {offsets = [0, 8], sizes = [16, 8], strides = [1, 1]} : vector<16x32xbf16> to vector<16x8xbf16>
    %cst_34 = arith.constant dense<0.000000e+00> : vector<16x16xf32>
    %58 = tpu.matmul %55, %56, %cst_34 {dimension_numbers = #tpu.dot_dimension_numbers<[1], [1], [0], [0], [0, 0, 1, 0], [], []>} : vector<16x8xbf16>, vector<16x8xbf16>, vector<16x16xf32> -> vector<16x16xf32>
    %cst_35 = arith.constant 0.353553385 : f32
    %59 = vector.broadcast %cst_35 : f32 to vector<16x16xf32>
    %60 = arith.mulf %58, %59 : vector<16x16xf32>
    %cst_36 = arith.constant -1.000000e+30 : f32
    %61 = vector.broadcast %cst_36 : f32 to vector<16x16xf32>
    %62 = arith.select %32, %60, %61 : vector<16x16xi1>, vector<16x16xf32>
    %cst_37 = arith.constant dense<0xFF800000> : vector<16xf32>
    %63 = vector.multi_reduction <maximumf>, %62, %cst_37 [1] : vector<16x16xf32> to vector<16xf32>
    %64 = vector.shape_cast %63 : vector<16xf32> to vector<16x1xf32>
    %65 = vector.broadcast %64 : vector<16x1xf32> to vector<16x16xf32>
    %66 = arith.subf %62, %65 : vector<16x16xf32>
    %67 = math.exp %66 : vector<16x16xf32>
    %cst_38 = arith.constant dense<0.000000e+00> : vector<16xf32>
    %68 = vector.multi_reduction <add>, %67, %cst_38 [1] : vector<16x16xf32> to vector<16xf32>
    %69 = vector.shape_cast %68 : vector<16xf32> to vector<16x1xf32>
    %70 = vector.broadcast %69 : vector<16x1xf32> to vector<16x16xf32>
    %71 = arith.divf %67, %70 : vector<16x16xf32>
    %72 = arith.addf %51, %71 : vector<16x16xf32>
    %73 = arith.truncf %71 : vector<16x16xf32> to vector<16x16xbf16>
    %cst_39 = arith.constant dense<0.000000e+00> : vector<16x8xf32>
    %74 = tpu.matmul %73, %57, %cst_39 {dimension_numbers = #tpu.dot_dimension_numbers<[1], [0], [0], [1], [0, 0, 1, 1], [], []>} : vector<16x16xbf16>, vector<16x8xbf16>, vector<16x8xf32> -> vector<16x8xf32>
    %75 = arith.truncf %74 : vector<16x8xf32> to vector<16x8xbf16>
    %76 = vector.extract_strided_slice %11 {offsets = [0, 16], sizes = [16, 8], strides = [1, 1]} : vector<16x32xbf16> to vector<16x8xbf16>
    %77 = vector.extract_strided_slice %19 {offsets = [0, 16], sizes = [16, 8], strides = [1, 1]} : vector<16x32xbf16> to vector<16x8xbf16>
    %78 = vector.extract_strided_slice %27 {offsets = [0, 16], sizes = [16, 8], strides = [1, 1]} : vector<16x32xbf16> to vector<16x8xbf16>
    %cst_40 = arith.constant dense<0.000000e+00> : vector<16x16xf32>
    %79 = tpu.matmul %76, %77, %cst_40 {dimension_numbers = #tpu.dot_dimension_numbers<[1], [1], [0], [0], [0, 0, 1, 0], [], []>} : vector<16x8xbf16>, vector<16x8xbf16>, vector<16x16xf32> -> vector<16x16xf32>
    %cst_41 = arith.constant 0.353553385 : f32
    %80 = vector.broadcast %cst_41 : f32 to vector<16x16xf32>
    %81 = arith.mulf %79, %80 : vector<16x16xf32>
    %cst_42 = arith.constant -1.000000e+30 : f32
    %82 = vector.broadcast %cst_42 : f32 to vector<16x16xf32>
    %83 = arith.select %32, %81, %82 : vector<16x16xi1>, vector<16x16xf32>
    %cst_43 = arith.constant dense<0xFF800000> : vector<16xf32>
    %84 = vector.multi_reduction <maximumf>, %83, %cst_43 [1] : vector<16x16xf32> to vector<16xf32>
    %85 = vector.shape_cast %84 : vector<16xf32> to vector<16x1xf32>
    %86 = vector.broadcast %85 : vector<16x1xf32> to vector<16x16xf32>
    %87 = arith.subf %83, %86 : vector<16x16xf32>
    %88 = math.exp %87 : vector<16x16xf32>
    %cst_44 = arith.constant dense<0.000000e+00> : vector<16xf32>
    %89 = vector.multi_reduction <add>, %88, %cst_44 [1] : vector<16x16xf32> to vector<16xf32>
    %90 = vector.shape_cast %89 : vector<16xf32> to vector<16x1xf32>
    %91 = vector.broadcast %90 : vector<16x1xf32> to vector<16x16xf32>
    %92 = arith.divf %88, %91 : vector<16x16xf32>
    %93 = arith.addf %72, %92 : vector<16x16xf32>
    %94 = arith.truncf %92 : vector<16x16xf32> to vector<16x16xbf16>
    %cst_45 = arith.constant dense<0.000000e+00> : vector<16x8xf32>
    %95 = tpu.matmul %94, %78, %cst_45 {dimension_numbers = #tpu.dot_dimension_numbers<[1], [0], [0], [1], [0, 0, 1, 1], [], []>} : vector<16x16xbf16>, vector<16x8xbf16>, vector<16x8xf32> -> vector<16x8xf32>
    %96 = arith.truncf %95 : vector<16x8xf32> to vector<16x8xbf16>
    %97 = vector.extract_strided_slice %11 {offsets = [0, 24], sizes = [16, 8], strides = [1, 1]} : vector<16x32xbf16> to vector<16x8xbf16>
    %98 = vector.extract_strided_slice %19 {offsets = [0, 24], sizes = [16, 8], strides = [1, 1]} : vector<16x32xbf16> to vector<16x8xbf16>
    %99 = vector.extract_strided_slice %27 {offsets = [0, 24], sizes = [16, 8], strides = [1, 1]} : vector<16x32xbf16> to vector<16x8xbf16>
    %cst_46 = arith.constant dense<0.000000e+00> : vector<16x16xf32>
    %100 = tpu.matmul %97, %98, %cst_46 {dimension_numbers = #tpu.dot_dimension_numbers<[1], [1], [0], [0], [0, 0, 1, 0], [], []>} : vector<16x8xbf16>, vector<16x8xbf16>, vector<16x16xf32> -> vector<16x16xf32>
    %cst_47 = arith.constant 0.353553385 : f32
    %101 = vector.broadcast %cst_47 : f32 to vector<16x16xf32>
    %102 = arith.mulf %100, %101 : vector<16x16xf32>
    %cst_48 = arith.constant -1.000000e+30 : f32
    %103 = vector.broadcast %cst_48 : f32 to vector<16x16xf32>
    %104 = arith.select %32, %102, %103 : vector<16x16xi1>, vector<16x16xf32>
    %cst_49 = arith.constant dense<0xFF800000> : vector<16xf32>
    %105 = vector.multi_reduction <maximumf>, %104, %cst_49 [1] : vector<16x16xf32> to vector<16xf32>
    %106 = vector.shape_cast %105 : vector<16xf32> to vector<16x1xf32>
    %107 = vector.broadcast %106 : vector<16x1xf32> to vector<16x16xf32>
    %108 = arith.subf %104, %107 : vector<16x16xf32>
    %109 = math.exp %108 : vector<16x16xf32>
    %cst_50 = arith.constant dense<0.000000e+00> : vector<16xf32>
    %110 = vector.multi_reduction <add>, %109, %cst_50 [1] : vector<16x16xf32> to vector<16xf32>
    %111 = vector.shape_cast %110 : vector<16xf32> to vector<16x1xf32>
    %112 = vector.broadcast %111 : vector<16x1xf32> to vector<16x16xf32>
    %113 = arith.divf %109, %112 : vector<16x16xf32>
    %114 = arith.addf %93, %113 : vector<16x16xf32>
    %115 = arith.truncf %113 : vector<16x16xf32> to vector<16x16xbf16>
    %cst_51 = arith.constant dense<0.000000e+00> : vector<16x8xf32>
    %116 = tpu.matmul %115, %99, %cst_51 {dimension_numbers = #tpu.dot_dimension_numbers<[1], [0], [0], [1], [0, 0, 1, 1], [], []>} : vector<16x16xbf16>, vector<16x8xbf16>, vector<16x8xf32> -> vector<16x8xf32>
    %117 = arith.truncf %116 : vector<16x8xf32> to vector<16x8xbf16>
    %cst_52 = arith.constant 2.500000e-01 : f32
    %118 = vector.broadcast %cst_52 : f32 to vector<16x16xf32>
    %119 = arith.mulf %114, %118 : vector<16x16xf32>
    %c0_53 = arith.constant 0 : index
    %c0_54 = arith.constant 0 : index
    %c0_55 = arith.constant 0 : index
    %c0_56 = arith.constant 0 : index
    %120 = vector.load %arg16[%c0_53, %c0_54, %c0_55, %c0_56] : memref<1x1x16x16xf32, #tpu.memory_space<vmem>>, vector<1x1x16x16xf32>
    %121 = vector.shape_cast %120 : vector<1x1x16x16xf32> to vector<16x16xf32>
    %122 = vector.shape_cast %119 : vector<16x16xf32> to vector<1x1x16x16xf32>
    tpu.vector_store %arg16[%c0_53, %c0_54, %c0_55, %c0_56], %122 {strides = array<i32>} : memref<1x1x16x16xf32, #tpu.memory_space<vmem>>, vector<1x1x16x16xf32>,
    %123 = tpu.concatenate %54, %75, %96, %117 in 1 : vector<16x8xbf16>, vector<16x8xbf16>, vector<16x8xbf16>, vector<16x8xbf16> -> vector<16x32xbf16>
    %c0_57 = arith.constant 0 : index
    %c0_58 = arith.constant 0 : index
    %c0_59 = arith.constant 0 : index
    %124 = vector.load %arg10[%c0_57, %c0_58, %c0_59] : memref<1x32x32xbf16, #tpu.memory_space<vmem>>, vector<1x32x32xbf16>
    %125 = vector.shape_cast %124 : vector<1x32x32xbf16> to vector<32x32xbf16>
    %cst_60 = arith.constant dense<0.000000e+00> : vector<16x32xf32>
    %126 = tpu.matmul %123, %125, %cst_60 {dimension_numbers = #tpu.dot_dimension_numbers<[1], [0], [0], [1], [0, 0, 1, 1], [], []>} : vector<16x32xbf16>, vector<32x32xbf16>, vector<16x32xf32> -> vector<16x32xf32>
    %c0_61 = arith.constant 0 : index
    %c0_62 = arith.constant 0 : index
    %c0_63 = arith.constant 0 : index
    %127 = vector.load %arg11[%c0_61, %c0_62, %c0_63] : memref<1x1x32xf32, #tpu.memory_space<vmem>>, vector<1x1x32xf32>
    %128 = vector.shape_cast %127 : vector<1x1x32xf32> to vector<1x32xf32>
    %129 = vector.broadcast %128 : vector<1x32xf32> to vector<16x32xf32>
    %130 = arith.addf %126, %129 : vector<16x32xf32>
    %c0_64 = arith.constant 0 : index
    %c0_65 = arith.constant 0 : index
    %131 = vector.load %arg12[%c0_64, %c0_65] : memref<32x32xbf16, #tpu.memory_space<vmem>>, vector<32x32xbf16>
    %cst_66 = arith.constant dense<0.000000e+00> : vector<16x32xf32>
    %132 = tpu.matmul %1, %131, %cst_66 {dimension_numbers = #tpu.dot_dimension_numbers<[1], [0], [0], [1], [0, 0, 1, 1], [], []>} : vector<16x32xbf16>, vector<32x32xbf16>, vector<16x32xf32> -> vector<16x32xf32>
    %133 = arith.truncf %130 : vector<16x32xf32> to vector<16x32xbf16>
    %c0_67 = arith.constant 0 : index
    %c0_68 = arith.constant 0 : index
    %134 = vector.load %arg13[%c0_67, %c0_68] : memref<32x32xbf16, #tpu.memory_space<vmem>>, vector<32x32xbf16>
    %cst_69 = arith.constant dense<0.000000e+00> : vector<16x32xf32>
    %135 = tpu.matmul %133, %134, %cst_69 {dimension_numbers = #tpu.dot_dimension_numbers<[1], [0], [0], [1], [0, 0, 1, 1], [], []>} : vector<16x32xbf16>, vector<32x32xbf16>, vector<16x32xf32> -> vector<16x32xf32>
    %136 = arith.addf %132, %135 : vector<16x32xf32>
    %c0_70 = arith.constant 0 : index
    %c0_71 = arith.constant 0 : index
    %137 = vector.load %arg14[%c0_70, %c0_71] : memref<1x32xf32, #tpu.memory_space<vmem>>, vector<1x32xf32>
    %138 = vector.broadcast %137 : vector<1x32xf32> to vector<16x32xf32>
    %139 = arith.addf %136, %138 : vector<16x32xf32>
    %140 = math.tanh %139 : vector<16x32xf32>
    %c0_72 = arith.constant 0 : index
    %c0_73 = arith.constant 0 : index
    %c0_74 = arith.constant 0 : index
    %c0_75 = arith.constant 0 : index
    %141 = vector.load %arg15[%c0_72, %c0_73, %c0_74, %c0_75] : memref<1x1x16x32xf32, #tpu.memory_space<vmem>>, vector<1x1x16x32xf32>
    %142 = vector.shape_cast %141 : vector<1x1x16x32xf32> to vector<16x32xf32>
    %143 = vector.shape_cast %140 : vector<16x32xf32> to vector<1x1x16x32xf32>
    tpu.vector_store %arg15[%c0_72, %c0_73, %c0_74, %c0_75], %143 {strides = array<i32>} : memref<1x1x16x32xf32, #tpu.memory_space<vmem>>, vector<1x1x16x32xf32>,
    return
  }
  func.func @transform_0(%arg0: i32, %arg1: i32) -> (i32, i32, i32, i32) {
    %c0_i32 = arith.constant 0 : i32
    %c0_i32_0 = arith.constant 0 : i32
    %c0_i32_1 = arith.constant 0 : i32
    return %arg0, %arg1, %c0_i32, %c0_i32_0 : i32, i32, i32, i32
  }
  func.func @transform_1(%arg0: i32, %arg1: i32) -> (i32, i32, i32, i32) {
    %c0_i32 = arith.constant 0 : i32
    %c0_i32_0 = arith.constant 0 : i32
    %c0_i32_1 = arith.constant 0 : i32
    return %arg0, %arg1, %c0_i32, %c0_i32_0 : i32, i32, i32, i32
  }
  func.func @transform_2(%arg0: i32, %arg1: i32) -> (i32, i32, i32) {
    %c0_i32 = arith.constant 0 : i32
    %c0_i32_0 = arith.constant 0 : i32
    %c0_i32_1 = arith.constant 0 : i32
    return %arg0, %c0_i32, %c0_i32_0 : i32, i32, i32
  }
  func.func @transform_3(%arg0: i32, %arg1: i32) -> (i32, i32, i32) {
    %c0_i32 = arith.constant 0 : i32
    %c0_i32_0 = arith.constant 0 : i32
    %c0_i32_1 = arith.constant 0 : i32
    return %arg0, %c0_i32, %c0_i32_0 : i32, i32, i32
  }
  func.func @transform_4(%arg0: i32, %arg1: i32) -> (i32, i32, i32) {
    %c0_i32 = arith.constant 0 : i32
    %c0_i32_0 = arith.constant 0 : i32
    %c0_i32_1 = arith.constant 0 : i32
    return %arg0, %c0_i32, %c0_i32_0 : i32, i32, i32
  }
  func.func @transform_5(%arg0: i32, %arg1: i32) -> (i32, i32, i32) {
    %c0_i32 = arith.constant 0 : i32
    %c0_i32_0 = arith.constant 0 : i32
    %c0_i32_1 = arith.constant 0 : i32
    return %arg0, %c0_i32, %c0_i32_0 : i32, i32, i32
  }
  func.func @transform_6(%arg0: i32, %arg1: i32) -> (i32, i32, i32) {
    %c0_i32 = arith.constant 0 : i32
    %c0_i32_0 = arith.constant 0 : i32
    %c0_i32_1 = arith.constant 0 : i32
    return %arg0, %c0_i32, %c0_i32_0 : i32, i32, i32
  }
  func.func @transform_7(%arg0: i32, %arg1: i32) -> (i32, i32, i32) {
    %c0_i32 = arith.constant 0 : i32
    %c0_i32_0 = arith.constant 0 : i32
    %c0_i32_1 = arith.constant 0 : i32
    return %arg0, %c0_i32, %c0_i32_0 : i32, i32, i32
  }
  func.func @transform_8(%arg0: i32, %arg1: i32) -> (i32, i32, i32) {
    %c0_i32 = arith.constant 0 : i32
    %c0_i32_0 = arith.constant 0 : i32
    %c0_i32_1 = arith.constant 0 : i32
    return %arg0, %c0_i32, %c0_i32_0 : i32, i32, i32
  }
  func.func @transform_9(%arg0: i32, %arg1: i32) -> (i32, i32, i32) {
    %c0_i32 = arith.constant 0 : i32
    %c0_i32_0 = arith.constant 0 : i32
    %c0_i32_1 = arith.constant 0 : i32
    return %arg0, %c0_i32, %c0_i32_0 : i32, i32, i32
  }
  func.func @transform_10(%arg0: i32, %arg1: i32) -> (i32, i32) {
    %c0_i32 = arith.constant 0 : i32
    %c0_i32_0 = arith.constant 0 : i32
    %c0_i32_1 = arith.constant 0 : i32
    return %c0_i32, %c0_i32_0 : i32, i32
  }
  func.func @transform_11(%arg0: i32, %arg1: i32) -> (i32, i32) {
    %c0_i32 = arith.constant 0 : i32
    %c0_i32_0 = arith.constant 0 : i32
    %c0_i32_1 = arith.constant 0 : i32
    return %c0_i32, %c0_i32_0 : i32, i32
  }
  func.func @transform_12(%arg0: i32, %arg1: i32) -> (i32, i32) {
    %c0_i32 = arith.constant 0 : i32
    %c0_i32_0 = arith.constant 0 : i32
    %c0_i32_1 = arith.constant 0 : i32
    return %c0_i32, %c0_i32_0 : i32, i32
  }
  func.func @transform_13(%arg0: i32, %arg1: i32) -> (i32, i32, i32, i32) {
    %c0_i32 = arith.constant 0 : i32
    %c0_i32_0 = arith.constant 0 : i32
    %c0_i32_1 = arith.constant 0 : i32
    return %arg0, %arg1, %c0_i32, %c0_i32_0 : i32, i32, i32, i32
  }
  func.func @transform_14(%arg0: i32, %arg1: i32) -> (i32, i32, i32, i32) {
    %c0_i32 = arith.constant 0 : i32
    %c0_i32_0 = arith.constant 0 : i32
    %c0_i32_1 = arith.constant 0 : i32
    return %arg0, %arg1, %c0_i32, %c0_i32_0 : i32, i32, i32, i32
  }
}

</mosaic_0001>

<llo_original>
// kernel: temporal_cross_alignment.1
$region0: #{temporal_cross_alignment.1}
  #allocation0 [shape = 'u32[]', space=smem, size = 0x4, offset = 0x4, fixed_abs, tag = 'smem constant byte address 0x4 - core index']
  #allocation1 [shape = 'u32[144,128]{1,0:T(1,128)}', space=vmem, size = 0x12000, scoped, tag = 'internal scratch']
  %s0 = inlined_call_operand.vmem [shape: bf16[2,2,16,32], index: 0, kind: input, shape index: {}]
  %s1 = inlined_call_operand.vmem [shape: bf16[2,2,16,32], index: 1, kind: input, shape index: {}]
  %s2 = inlined_call_operand.vmem [shape: bf16[2,32,32], index: 2, kind: input, shape index: {}]
  %s3 = inlined_call_operand.vmem [shape: bf16[2,32,32], index: 3, kind: input, shape index: {}]
  %s4 = inlined_call_operand.vmem [shape: bf16[2,32,32], index: 4, kind: input, shape index: {}]
  %s5 = inlined_call_operand.vmem [shape: f32[2,1,32], index: 5, kind: input, shape index: {}]
  %s6 = inlined_call_operand.vmem [shape: f32[2,1,32], index: 6, kind: input, shape index: {}]
  %s7 = inlined_call_operand.vmem [shape: f32[2,1,32], index: 7, kind: input, shape index: {}]
  %s8 = inlined_call_operand.vmem [shape: bf16[2,32,32], index: 8, kind: input, shape index: {}]
  %s9 = inlined_call_operand.vmem [shape: f32[2,1,32], index: 9, kind: input, shape index: {}]
  %s10 = inlined_call_operand.vmem [shape: bf16[32,32], index: 10, kind: input, shape index: {}]
  %s11 = inlined_call_operand.vmem [shape: bf16[32,32], index: 11, kind: input, shape index: {}]
  %s12 = inlined_call_operand.vmem [shape: f32[1,32], index: 12, kind: input, shape index: {}]
  %s13 = inlined_call_operand.vmem [shape: f32[2,2,16,32], index: 13, kind: output, shape index: {0}]
  %s14 = inlined_call_operand.vmem [shape: f32[2,2,16,16], index: 14, kind: output, shape index: {1}]
  %15 = xla_tuple %s13, %s14
  %s16 = sld [smem:[#allocation0]]
  $region93: #{temporal_cross_alignment.1} parent=0
    _
  %s18 = ssub.s32 1, %s16
  %s19 = scalar_select 0, %s18, %s16
  loop: start=0, step=1, limit=6
  $region2: #{temporal_cross_alignment.1} parent=0 // loop_pre_header
    _
  $region3: #{temporal_cross_alignment.1} parent=0 // loop_header
    %s21 = sphi 0, %s25
    %p22 = scmp.ge.s32.totalorder %s21, 6
    %s28 = sphi 0, %s40
    %s29 = sphi 0, %s36
    %s30 = sphi 0, %s28
    %s31 = sphi 0, %s29
    %s32 = sphi 0, %s30
    %s33 = sphi 0, %s31
    %s45 = sphi 0, %s47
    %s48 = sphi 0, %s45
    %s49 = sphi 0, %s48
    %s65 = sphi 0, %s49
    %s73 = sphi 0, %s75
    %s76 = sphi 0, %s73
    %s77 = sphi 0, %s76
    %s93 = sphi 0, %s77
    %s99 = sphi 0, %s101
    %s102 = sphi 0, %s99
    %s103 = sphi 0, %s102
    %s119 = sphi 0, %s103
    %s125 = sphi 0, %s127
    %s128 = sphi 0, %s125
    %s129 = sphi 0, %s128
    %s145 = sphi 0, %s129
    %s151 = sphi 0, %s153
    %s154 = sphi 0, %s151
    %s155 = sphi 0, %s154
    %s171 = sphi 0, %s155
    %s177 = sphi 0, %s179
    %s180 = sphi 0, %s177
    %s181 = sphi 0, %s180
    %s197 = sphi 0, %s181
    %s203 = sphi 0, %s205
    %s206 = sphi 0, %s203
    %s207 = sphi 0, %s206
    %s223 = sphi 0, %s207
    %s229 = sphi 0, %s231
    %s232 = sphi 0, %s229
    %s233 = sphi 0, %s232
    %s249 = sphi 0, %s233
    %s255 = sphi 0, %s257
    %s258 = sphi 0, %s255
    %s259 = sphi 0, %s258
    %s275 = sphi 0, %s259
    %s281 = sphi 0, %s283
    %s284 = sphi 0, %s281
    %s285 = sphi 0, %s284
    %s301 = sphi 0, %s285
    %s305 = sphi 0, %s305
    %s307 = sphi 0, %s305
    %s308 = sphi 0, %s307
    %s322 = sphi 0, %s308
    %s326 = sphi 0, %s326
    %s328 = sphi 0, %s326
    %s329 = sphi 0, %s328
    %s343 = sphi 0, %s329
    %s347 = sphi 0, %s347
    %s349 = sphi 0, %s347
    %s350 = sphi 0, %s349
    %s364 = sphi 0, %s350
    %s372 = sphi 0, %s374
    %s375 = sphi 0, %s372
    %s376 = sphi 0, %s375
    %s392 = sphi 0, %s376
    %s400 = sphi 0, %s402
    %s403 = sphi 0, %s400
    %s404 = sphi 0, %s403
    %s420 = sphi 0, %s404
  $region4: #{temporal_cross_alignment.1} parent=0 // loop_header_branch
    %24 = sbr.rel (%p22) target = $region8
  $region5: #{temporal_cross_alignment.1} parent=0 // loop_body
    %s26 = ssub.s32 %s21, 1
    %s27 = ssub.s32 %s21, 2
    %s34 = sadd.s32 1, %s29
    %p35 = scmp.ge.s32.totalorder %s34, 2
    %s36 = scalar_select %p35, 0, %s34
    %s37 = sadd.s32 1, %s28
    %s38 = scalar_select %p35, %s37, %s28
    %p39 = scmp.ge.s32.totalorder %s38, 2
    %s40 = scalar_select %p39, 0, %s38
    %s41 = ssub.s32 %s28, %s40
    %s42 = ssub.s32 %s29, %s36
    %s43 = sor.u32 %s41, %s42
    %p44 = scmp.eq.s32.totalorder %s43, 0
    %s46 = sadd.s32 %s45, 1
    %s47 = scalar_select %p44, %s45, %s46
    %p50 = pneg %p44
    %p51 = scmp.eq.s32.totalorder %s21, 3
    %p52 = por %p50, %p51
    %p53 = scmp.ne.s32.totalorder %s45, %s48
    %p54 = scmp.eq.s32.totalorder %s21, 0
    %p55 = por %p53, %p54
    %p56 = scmp.ne.s32.totalorder %s45, %s48
    %p57 = scmp.eq.s32.totalorder %s26, 3
    %p58 = por %p56, %p57
    %p59 = scmp.ne.s32.totalorder %s48, %s49
    %p60 = scmp.eq.s32.totalorder %s26, 0
    %p61 = por %p59, %p60
    %p62 = scmp.ne.s32.totalorder %s48, %s49
    %p63 = scmp.eq.s32.totalorder %s27, 3
    %p64 = por %p62, %p63
    %p66 = scmp.ne.s32.totalorder %s49, %s65
    %p67 = scmp.eq.s32.totalorder %s27, 0
    %p68 = por %p66, %p67
    %s69 = ssub.s32 %s28, %s40
    %s70 = ssub.s32 %s29, %s36
    %s71 = sor.u32 %s69, %s70
    %p72 = scmp.eq.s32.totalorder %s71, 0
    %s74 = sadd.s32 %s73, 1
    %s75 = scalar_select %p72, %s73, %s74
    %p78 = pneg %p72
    %p79 = scmp.eq.s32.totalorder %s21, 3
    %p80 = por %p78, %p79
    %p81 = scmp.ne.s32.totalorder %s73, %s76
    %p82 = scmp.eq.s32.totalorder %s21, 0
    %p83 = por %p81, %p82
    %p84 = scmp.ne.s32.totalorder %s73, %s76
    %p85 = scmp.eq.s32.totalorder %s26, 3
    %p86 = por %p84, %p85
    %p87 = scmp.ne.s32.totalorder %s76, %s77
    %p88 = scmp.eq.s32.totalorder %s26, 0
    %p89 = por %p87, %p88
    %p90 = scmp.ne.s32.totalorder %s76, %s77
    %p91 = scmp.eq.s32.totalorder %s27, 3
    %p92 = por %p90, %p91
    %p94 = scmp.ne.s32.totalorder %s77, %s93
    %p95 = scmp.eq.s32.totalorder %s27, 0
    %p96 = por %p94, %p95
    %s97 = ssub.s32 %s28, %s40
    %p98 = scmp.eq.s32.totalorder %s97, 0
    %s100 = sadd.s32 %s99, 1
    %s101 = scalar_select %p98, %s99, %s100
    %p104 = pneg %p98
    %p105 = scmp.eq.s32.totalorder %s21, 3
    %p106 = por %p104, %p105
    %p107 = scmp.ne.s32.totalorder %s99, %s102
    %p108 = scmp.eq.s32.totalorder %s21, 0
    %p109 = por %p107, %p108
    %p110 = scmp.ne.s32.totalorder %s99, %s102
    %p111 = scmp.eq.s32.totalorder %s26, 3
    %p112 = por %p110, %p111
    %p113 = scmp.ne.s32.totalorder %s102, %s103
    %p114 = scmp.eq.s32.totalorder %s26, 0
    %p115 = por %p113, %p114
    %p116 = scmp.ne.s32.totalorder %s102, %s103
    %p117 = scmp.eq.s32.totalorder %s27, 3
    %p118 = por %p116, %p117
    %p120 = scmp.ne.s32.totalorder %s103, %s119
    %p121 = scmp.eq.s32.totalorder %s27, 0
    %p122 = por %p120, %p121
    %s123 = ssub.s32 %s28, %s40
    %p124 = scmp.eq.s32.totalorder %s123, 0
    %s126 = sadd.s32 %s125, 1
    %s127 = scalar_select %p124, %s125, %s126
    %p130 = pneg %p124
    %p131 = scmp.eq.s32.totalorder %s21, 3
    %p132 = por %p130, %p131
    %p133 = scmp.ne.s32.totalorder %s125, %s128
    %p134 = scmp.eq.s32.totalorder %s21, 0
    %p135 = por %p133, %p134
    %p136 = scmp.ne.s32.totalorder %s125, %s128
    %p137 = scmp.eq.s32.totalorder %s26, 3
    %p138 = por %p136, %p137
    %p139 = scmp.ne.s32.totalorder %s128, %s129
    %p140 = scmp.eq.s32.totalorder %s26, 0
    %p141 = por %p139, %p140
    %p142 = scmp.ne.s32.totalorder %s128, %s129
    %p143 = scmp.eq.s32.totalorder %s27, 3
    %p144 = por %p142, %p143
    %p146 = scmp.ne.s32.totalorder %s129, %s145
    %p147 = scmp.eq.s32.totalorder %s27, 0
    %p148 = por %p146, %p147
    %s149 = ssub.s32 %s28, %s40
    %p150 = scmp.eq.s32.totalorder %s149, 0
    %s152 = sadd.s32 %s151, 1
    %s153 = scalar_select %p150, %s151, %s152
    %p156 = pneg %p150
    %p157 = scmp.eq.s32.totalorder %s21, 3
    %p158 = por %p156, %p157
    %p159 = scmp.ne.s32.totalorder %s151, %s154
    %p160 = scmp.eq.s32.totalorder %s21, 0
    %p161 = por %p159, %p160
    %p162 = scmp.ne.s32.totalorder %s151, %s154
    %p163 = scmp.eq.s32.totalorder %s26, 3
    %p164 = por %p162, %p163
    %p165 = scmp.ne.s32.totalorder %s154, %s155
    %p166 = scmp.eq.s32.totalorder %s26, 0
    %p167 = por %p165, %p166
    %p168 = scmp.ne.s32.totalorder %s154, %s155
    %p169 = scmp.eq.s32.totalorder %s27, 3
    %p170 = por %p168, %p169
    %p172 = scmp.ne.s32.totalorder %s155, %s171
    %p173 = scmp.eq.s32.totalorder %s27, 0
    %p174 = por %p172, %p173
    %s175 = ssub.s32 %s28, %s40
    %p176 = scmp.eq.s32.totalorder %s175, 0
    %s178 = sadd.s32 %s177, 1
    %s179 = scalar_select %p176, %s177, %s178
    %p182 = pneg %p176
    %p183 = scmp.eq.s32.totalorder %s21, 3
    %p184 = por %p182, %p183
    %p185 = scmp.ne.s32.totalorder %s177, %s180
    %p186 = scmp.eq.s32.totalorder %s21, 0
    %p187 = por %p185, %p186
    %p188 = scmp.ne.s32.totalorder %s177, %s180
    %p189 = scmp.eq.s32.totalorder %s26, 3
    %p190 = por %p188, %p189
    %p191 = scmp.ne.s32.totalorder %s180, %s181
    %p192 = scmp.eq.s32.totalorder %s26, 0
    %p193 = por %p191, %p192
    %p194 = scmp.ne.s32.totalorder %s180, %s181
    %p195 = scmp.eq.s32.totalorder %s27, 3
    %p196 = por %p194, %p195
    %p198 = scmp.ne.s32.totalorder %s181, %s197
    %p199 = scmp.eq.s32.totalorder %s27, 0
    %p200 = por %p198, %p199
    %s201 = ssub.s32 %s28, %s40
    %p202 = scmp.eq.s32.totalorder %s201, 0
    %s204 = sadd.s32 %s203, 1
    %s205 = scalar_select %p202, %s203, %s204
    %p208 = pneg %p202
    %p209 = scmp.eq.s32.totalorder %s21, 3
    %p210 = por %p208, %p209
    %p211 = scmp.ne.s32.totalorder %s203, %s206
    %p212 = scmp.eq.s32.totalorder %s21, 0
    %p213 = por %p211, %p212
    %p214 = scmp.ne.s32.totalorder %s203, %s206
    %p215 = scmp.eq.s32.totalorder %s26, 3
    %p216 = por %p214, %p215
    %p217 = scmp.ne.s32.totalorder %s206, %s207
    %p218 = scmp.eq.s32.totalorder %s26, 0
    %p219 = por %p217, %p218
    %p220 = scmp.ne.s32.totalorder %s206, %s207
    %p221 = scmp.eq.s32.totalorder %s27, 3
    %p222 = por %p220, %p221
    %p224 = scmp.ne.s32.totalorder %s207, %s223
    %p225 = scmp.eq.s32.totalorder %s27, 0
    %p226 = por %p224, %p225
    %s227 = ssub.s32 %s28, %s40
    %p228 = scmp.eq.s32.totalorder %s227, 0
    %s230 = sadd.s32 %s229, 1
    %s231 = scalar_select %p228, %s229, %s230
    %p234 = pneg %p228
    %p235 = scmp.eq.s32.totalorder %s21, 3
    %p236 = por %p234, %p235
    %p237 = scmp.ne.s32.totalorder %s229, %s232
    %p238 = scmp.eq.s32.totalorder %s21, 0
    %p239 = por %p237, %p238
    %p240 = scmp.ne.s32.totalorder %s229, %s232
    %p241 = scmp.eq.s32.totalorder %s26, 3
    %p242 = por %p240, %p241
    %p243 = scmp.ne.s32.totalorder %s232, %s233
    %p244 = scmp.eq.s32.totalorder %s26, 0
    %p245 = por %p243, %p244
    %p246 = scmp.ne.s32.totalorder %s232, %s233
    %p247 = scmp.eq.s32.totalorder %s27, 3
    %p248 = por %p246, %p247
    %p250 = scmp.ne.s32.totalorder %s233, %s249
    %p251 = scmp.eq.s32.totalorder %s27, 0
    %p252 = por %p250, %p251
    %s253 = ssub.s32 %s28, %s40
    %p254 = scmp.eq.s32.totalorder %s253, 0
    %s256 = sadd.s32 %s255, 1
    %s257 = scalar_select %p254, %s255, %s256
    %p260 = pneg %p254
    %p261 = scmp.eq.s32.totalorder %s21, 3
    %p262 = por %p260, %p261
    %p263 = scmp.ne.s32.totalorder %s255, %s258
    %p264 = scmp.eq.s32.totalorder %s21, 0
    %p265 = por %p263, %p264
    %p266 = scmp.ne.s32.totalorder %s255, %s258
    %p267 = scmp.eq.s32.totalorder %s26, 3
    %p268 = por %p266, %p267
    %p269 = scmp.ne.s32.totalorder %s258, %s259
    %p270 = scmp.eq.s32.totalorder %s26, 0
    %p271 = por %p269, %p270
    %p272 = scmp.ne.s32.totalorder %s258, %s259
    %p273 = scmp.eq.s32.totalorder %s27, 3
    %p274 = por %p272, %p273
    %p276 = scmp.ne.s32.totalorder %s259, %s275
    %p277 = scmp.eq.s32.totalorder %s27, 0
    %p278 = por %p276, %p277
    %s279 = ssub.s32 %s28, %s40
    %p280 = scmp.eq.s32.totalorder %s279, 0
    %s282 = sadd.s32 %s281, 1
    %s283 = scalar_select %p280, %s281, %s282
    %p286 = pneg %p280
    %p287 = scmp.eq.s32.totalorder %s21, 3
    %p288 = por %p286, %p287
    %p289 = scmp.ne.s32.totalorder %s281, %s284
    %p290 = scmp.eq.s32.totalorder %s21, 0
    %p291 = por %p289, %p290
    %p292 = scmp.ne.s32.totalorder %s281, %s284
    %p293 = scmp.eq.s32.totalorder %s26, 3
    %p294 = por %p292, %p293
    %p295 = scmp.ne.s32.totalorder %s284, %s285
    %p296 = scmp.eq.s32.totalorder %s26, 0
    %p297 = por %p295, %p296
    %p298 = scmp.ne.s32.totalorder %s284, %s285
    %p299 = scmp.eq.s32.totalorder %s27, 3
    %p300 = por %p298, %p299
    %p302 = scmp.ne.s32.totalorder %s285, %s301
    %p303 = scmp.eq.s32.totalorder %s27, 0
    %p304 = por %p302, %p303
    %s306 = sadd.s32 %s305, 1
    %p309 = scmp.eq.s32.totalorder %s21, 3
    %p310 = scmp.ne.s32.totalorder %s305, %s307
    %p311 = scmp.eq.s32.totalorder %s21, 0
    %p312 = por %p310, %p311
    %p313 = scmp.ne.s32.totalorder %s305, %s307
    %p314 = scmp.eq.s32.totalorder %s26, 3
    %p315 = por %p313, %p314
    %p316 = scmp.ne.s32.totalorder %s307, %s308
    %p317 = scmp.eq.s32.totalorder %s26, 0
    %p318 = por %p316, %p317
    %p319 = scmp.ne.s32.totalorder %s307, %s308
    %p320 = scmp.eq.s32.totalorder %s27, 3
    %p321 = por %p319, %p320
    %p323 = scmp.ne.s32.totalorder %s308, %s322
    %p324 = scmp.eq.s32.totalorder %s27, 0
    %p325 = por %p323, %p324
    %s327 = sadd.s32 %s326, 1
    %p330 = scmp.eq.s32.totalorder %s21, 3
    %p331 = scmp.ne.s32.totalorder %s326, %s328
    %p332 = scmp.eq.s32.totalorder %s21, 0
    %p333 = por %p331, %p332
    %p334 = scmp.ne.s32.totalorder %s326, %s328
    %p335 = scmp.eq.s32.totalorder %s26, 3
    %p336 = por %p334, %p335
    %p337 = scmp.ne.s32.totalorder %s328, %s329
    %p338 = scmp.eq.s32.totalorder %s26, 0
    %p339 = por %p337, %p338
    %p340 = scmp.ne.s32.totalorder %s328, %s329
    %p341 = scmp.eq.s32.totalorder %s27, 3
    %p342 = por %p340, %p341
    %p344 = scmp.ne.s32.totalorder %s329, %s343
    %p345 = scmp.eq.s32.totalorder %s27, 0
    %p346 = por %p344, %p345
    %s348 = sadd.s32 %s347, 1
    %p351 = scmp.eq.s32.totalorder %s21, 3
    %p352 = scmp.ne.s32.totalorder %s347, %s349
    %p353 = scmp.eq.s32.totalorder %s21, 0
    %p354 = por %p352, %p353
    %p355 = scmp.ne.s32.totalorder %s347, %s349
    %p356 = scmp.eq.s32.totalorder %s26, 3
    %p357 = por %p355, %p356
    %p358 = scmp.ne.s32.totalorder %s349, %s350
    %p359 = scmp.eq.s32.totalorder %s26, 0
    %p360 = por %p358, %p359
    %p361 = scmp.ne.s32.totalorder %s349, %s350
    %p362 = scmp.eq.s32.totalorder %s27, 3
    %p363 = por %p361, %p362
    %p365 = scmp.ne.s32.totalorder %s350, %s364
    %p366 = scmp.eq.s32.totalorder %s27, 0
    %p367 = por %p365, %p366
    %s368 = ssub.s32 %s28, %s40
    %s369 = ssub.s32 %s29, %s36
    %s370 = sor.u32 %s368, %s369
    %p371 = scmp.eq.s32.totalorder %s370, 0
    %s373 = sadd.s32 %s372, 1
    %s374 = scalar_select %p371, %s372, %s373
    %p377 = pneg %p371
    %p378 = scmp.eq.s32.totalorder %s21, 3
    %p379 = por %p377, %p378
    %p380 = scmp.ne.s32.totalorder %s372, %s375
    %p381 = scmp.eq.s32.totalorder %s21, 0
    %p382 = por %p380, %p381
    %p383 = scmp.ne.s32.totalorder %s372, %s375
    %p384 = scmp.eq.s32.totalorder %s26, 3
    %p385 = por %p383, %p384
    %p386 = scmp.ne.s32.totalorder %s375, %s376
    %p387 = scmp.eq.s32.totalorder %s26, 0
    %p388 = por %p386, %p387
    %p389 = scmp.ne.s32.totalorder %s375, %s376
    %p390 = scmp.eq.s32.totalorder %s27, 3
    %p391 = por %p389, %p390
    %p393 = scmp.ne.s32.totalorder %s376, %s392
    %p394 = scmp.eq.s32.totalorder %s27, 0
    %p395 = por %p393, %p394
    %s396 = ssub.s32 %s28, %s40
    %s397 = ssub.s32 %s29, %s36
    %s398 = sor.u32 %s396, %s397
    %p399 = scmp.eq.s32.totalorder %s398, 0
    %s401 = sadd.s32 %s400, 1
    %s402 = scalar_select %p399, %s400, %s401
    %p405 = pneg %p399
    %p406 = scmp.eq.s32.totalorder %s21, 3
    %p407 = por %p405, %p406
    %p408 = scmp.ne.s32.totalorder %s400, %s403
    %p409 = scmp.eq.s32.totalorder %s21, 0
    %p410 = por %p408, %p409
    %p411 = scmp.ne.s32.totalorder %s400, %s403
    %p412 = scmp.eq.s32.totalorder %s26, 3
    %p413 = por %p411, %p412
    %p414 = scmp.ne.s32.totalorder %s403, %s404
    %p415 = scmp.eq.s32.totalorder %s26, 0
    %p416 = por %p414, %p415
    %p417 = scmp.ne.s32.totalorder %s403, %s404
    %p418 = scmp.eq.s32.totalorder %s27, 3
    %p419 = por %p417, %p418
    %p421 = scmp.ne.s32.totalorder %s404, %s420
    %p422 = scmp.eq.s32.totalorder %s27, 0
    %p423 = por %p421, %p422
    %p424 = scmp.le.s32.totalorder 1, %s21
    %p425 = scmp.lt.s32.totalorder %s21, 5
    %p426 = pnand %p424, %p425
    %p427 = pneg %p426
    // Predicated region
    $region9: #{temporal_cross_alignment.1} parent=5 // pred_check
      _
    $region10: #{temporal_cross_alignment.1} parent=5 // pred_check_branch
      %429 = sbr.rel (%p426) target = $region12
    $region11: #{temporal_cross_alignment.1} parent=5 // pred_region
      %s430 = ssub.s32 %s21, 1
      // Predicated region
      $region13: #{temporal_cross_alignment.1} parent=11 // pred_check
        %p431 = pneg %p318
      $region14: #{temporal_cross_alignment.1} parent=11 // pred_check_branch
        %433 = sbr.rel (%p431) target = $region16
      $region15: #{temporal_cross_alignment.1} parent=11 // pred_region
        _
      $region16: #{temporal_cross_alignment.1} parent=11 // pred_fallthru
        _
      // Predicated region
      $region17: #{temporal_cross_alignment.1} parent=11 // pred_check
        %p434 = pneg %p339
      $region18: #{temporal_cross_alignment.1} parent=11 // pred_check_branch
        %436 = sbr.rel (%p434) target = $region20
      $region19: #{temporal_cross_alignment.1} parent=11 // pred_region
        _
      $region20: #{temporal_cross_alignment.1} parent=11 // pred_fallthru
        _
      // Predicated region
      $region21: #{temporal_cross_alignment.1} parent=11 // pred_check
        %p437 = pneg %p360
      $region22: #{temporal_cross_alignment.1} parent=11 // pred_check_branch
        %439 = sbr.rel (%p437) target = $region24
      $region23: #{temporal_cross_alignment.1} parent=11 // pred_region
        _
      $region24: #{temporal_cross_alignment.1} parent=11 // pred_fallthru
        _
    $region12: #{temporal_cross_alignment.1} parent=5 // pred_fallthru
      _
    %p440 = scmp.lt.s32.totalorder %s21, 4
    // Predicated region
    $region25: #{temporal_cross_alignment.1} parent=5 // pred_check
      %p441 = pneg %p440
    $region26: #{temporal_cross_alignment.1} parent=5 // pred_check_branch
      %443 = sbr.rel (%p441) target = $region28
    $region27: #{temporal_cross_alignment.1} parent=5 // pred_region
      // Predicated region
      $region29: #{temporal_cross_alignment.1} parent=27 // pred_check
        %p444 = pneg %p55
      $region30: #{temporal_cross_alignment.1} parent=27 // pred_check_branch
        %446 = sbr.rel (%p444) target = $region32
      $region31: #{temporal_cross_alignment.1} parent=27 // pred_region
        %p447 = scmp.lt.s32.totalorder %s28, 1
        %s448 = scalar_select %p447, %s28, 1
        %p449 = scmp.lt.s32.totalorder %s29, 1
        %s450 = scalar_select %p449, %s29, 1
        %s451 = smul.addr %s450, 2
        %s452 = smul.addr %s448, 4
        %s453 = sadd.s32 %s451, %s452
        %s454 = smul.addr %s453, 4
        %s455 = scalar_lea.vmem %s0, %s454
      $region32: #{temporal_cross_alignment.1} parent=27 // pred_fallthru
        _
      // Predicated region
      $region33: #{temporal_cross_alignment.1} parent=27 // pred_check
        %p456 = pneg %p83
      $region34: #{temporal_cross_alignment.1} parent=27 // pred_check_branch
        %458 = sbr.rel (%p456) target = $region36
      $region35: #{temporal_cross_alignment.1} parent=27 // pred_region
        %p459 = scmp.lt.s32.totalorder %s28, 1
        %s460 = scalar_select %p459, %s28, 1
        %p461 = scmp.lt.s32.totalorder %s29, 1
        %s462 = scalar_select %p461, %s29, 1
        %s463 = smul.addr %s462, 2
        %s464 = smul.addr %s460, 4
        %s465 = sadd.s32 %s463, %s464
        %s466 = smul.addr %s465, 4
        %s467 = scalar_lea.vmem %s1, %s466
      $region36: #{temporal_cross_alignment.1} parent=27 // pred_fallthru
        _
      // Predicated region
      $region37: #{temporal_cross_alignment.1} parent=27 // pred_check
        %p468 = pneg %p109
      $region38: #{temporal_cross_alignment.1} parent=27 // pred_check_branch
        %470 = sbr.rel (%p468) target = $region40
      $region39: #{temporal_cross_alignment.1} parent=27 // pred_region
        %p471 = scmp.lt.s32.totalorder %s28, 1
        %s472 = scalar_select %p471, %s28, 1
        %s473 = smul.addr %s472, 4
        %s474 = smul.addr %s473, 4
        %s475 = scalar_lea.vmem %s2, %s474
      $region40: #{temporal_cross_alignment.1} parent=27 // pred_fallthru
        _
      // Predicated region
      $region41: #{temporal_cross_alignment.1} parent=27 // pred_check
        %p476 = pneg %p135
      $region42: #{temporal_cross_alignment.1} parent=27 // pred_check_branch
        %478 = sbr.rel (%p476) target = $region44
      $region43: #{temporal_cross_alignment.1} parent=27 // pred_region
        %p479 = scmp.lt.s32.totalorder %s28, 1
        %s480 = scalar_select %p479, %s28, 1
        %s481 = smul.addr %s480, 4
        %s482 = smul.addr %s481, 4
        %s483 = scalar_lea.vmem %s3, %s482
      $region44: #{temporal_cross_alignment.1} parent=27 // pred_fallthru
        _
      // Predicated region
      $region45: #{temporal_cross_alignment.1} parent=27 // pred_check
        %p484 = pneg %p161
      $region46: #{temporal_cross_alignment.1} parent=27 // pred_check_branch
        %486 = sbr.rel (%p484) target = $region48
      $region47: #{temporal_cross_alignment.1} parent=27 // pred_region
        %p487 = scmp.lt.s32.totalorder %s28, 1
        %s488 = scalar_select %p487, %s28, 1
        %s489 = smul.addr %s488, 4
        %s490 = smul.addr %s489, 4
        %s491 = scalar_lea.vmem %s4, %s490
      $region48: #{temporal_cross_alignment.1} parent=27 // pred_fallthru
        _
      // Predicated region
      $region49: #{temporal_cross_alignment.1} parent=27 // pred_check
        %p492 = pneg %p187
      $region50: #{temporal_cross_alignment.1} parent=27 // pred_check_branch
        %494 = sbr.rel (%p492) target = $region52
      $region51: #{temporal_cross_alignment.1} parent=27 // pred_region
        %p495 = scmp.lt.s32.totalorder %s28, 1
        %s496 = scalar_select %p495, %s28, 1
        %s497 = scalar_lea.vmem %s5, %s496
      $region52: #{temporal_cross_alignment.1} parent=27 // pred_fallthru
        _
      // Predicated region
      $region53: #{temporal_cross_alignment.1} parent=27 // pred_check
        %p498 = pneg %p213
      $region54: #{temporal_cross_alignment.1} parent=27 // pred_check_branch
        %500 = sbr.rel (%p498) target = $region56
      $region55: #{temporal_cross_alignment.1} parent=27 // pred_region
        %p501 = scmp.lt.s32.totalorder %s28, 1
        %s502 = scalar_select %p501, %s28, 1
        %s503 = scalar_lea.vmem %s6, %s502
      $region56: #{temporal_cross_alignment.1} parent=27 // pred_fallthru
        _
      // Predicated region
      $region57: #{temporal_cross_alignment.1} parent=27 // pred_check
        %p504 = pneg %p239
      $region58: #{temporal_cross_alignment.1} parent=27 // pred_check_branch
        %506 = sbr.rel (%p504) target = $region60
      $region59: #{temporal_cross_alignment.1} parent=27 // pred_region
        %p507 = scmp.lt.s32.totalorder %s28, 1
        %s508 = scalar_select %p507, %s28, 1
        %s509 = scalar_lea.vmem %s7, %s508
      $region60: #{temporal_cross_alignment.1} parent=27 // pred_fallthru
        _
      // Predicated region
      $region61: #{temporal_cross_alignment.1} parent=27 // pred_check
        %p510 = pneg %p265
      $region62: #{temporal_cross_alignment.1} parent=27 // pred_check_branch
        %512 = sbr.rel (%p510) target = $region64
      $region63: #{temporal_cross_alignment.1} parent=27 // pred_region
        %p513 = scmp.lt.s32.totalorder %s28, 1
        %s514 = scalar_select %p513, %s28, 1
        %s515 = smul.addr %s514, 4
        %s516 = smul.addr %s515, 4
        %s517 = scalar_lea.vmem %s8, %s516
      $region64: #{temporal_cross_alignment.1} parent=27 // pred_fallthru
        _
      // Predicated region
      $region65: #{temporal_cross_alignment.1} parent=27 // pred_check
        %p518 = pneg %p291
      $region66: #{temporal_cross_alignment.1} parent=27 // pred_check_branch
        %520 = sbr.rel (%p518) target = $region68
      $region67: #{temporal_cross_alignment.1} parent=27 // pred_region
        %p521 = scmp.lt.s32.totalorder %s28, 1
        %s522 = scalar_select %p521, %s28, 1
        %s523 = scalar_lea.vmem %s9, %s522
      $region68: #{temporal_cross_alignment.1} parent=27 // pred_fallthru
        _
    $region28: #{temporal_cross_alignment.1} parent=5 // pred_fallthru
      _
    %p524 = scmp.le.s32.totalorder 1, %s21
    %p525 = scmp.lt.s32.totalorder %s21, 5
    %p526 = pnand %p524, %p525
    %p527 = pneg %p526
    // Predicated region
    $region69: #{temporal_cross_alignment.1} parent=5 // pred_check
      _
    $region70: #{temporal_cross_alignment.1} parent=5 // pred_check_branch
      %529 = sbr.rel (%p526) target = $region72
    $region71: #{temporal_cross_alignment.1} parent=5 // pred_region
      %s530 = ssub.s32 %s21, 1
      %p531 = scmp.lt.s32.totalorder %s30, 1
      %s532 = scalar_select %p531, %s30, 1
      %p533 = scmp.lt.s32.totalorder %s31, 1
      %s534 = scalar_select %p533, %s31, 1
      %s535 = smul.addr %s534, 2
      %s536 = smul.addr %s532, 4
      %s537 = sadd.s32 %s535, %s536
      %s538 = smul.addr %s537, 4
      %s539 = scalar_lea.vmem %s0, %s538
      %p540 = pneg %p61
      %p541 = pneg %p58
      %p542 = scmp.lt.s32.totalorder %s30, 1
      %s543 = scalar_select %p542, %s30, 1
      %p544 = scmp.lt.s32.totalorder %s31, 1
      %s545 = scalar_select %p544, %s31, 1
      %s546 = smul.addr %s545, 2
      %s547 = smul.addr %s543, 4
      %s548 = sadd.s32 %s546, %s547
      %s549 = smul.addr %s548, 4
      %s550 = scalar_lea.vmem %s1, %s549
      %p551 = pneg %p89
      %p552 = pneg %p86
      %p553 = scmp.lt.s32.totalorder %s30, 1
      %s554 = scalar_select %p553, %s30, 1
      %s555 = smul.addr %s554, 4
      %s556 = smul.addr %s555, 4
      %s557 = scalar_lea.vmem %s2, %s556
      %p558 = pneg %p115
      %p559 = pneg %p112
      %p560 = scmp.lt.s32.totalorder %s30, 1
      %s561 = scalar_select %p560, %s30, 1
      %s562 = smul.addr %s561, 4
      %s563 = smul.addr %s562, 4
      %s564 = scalar_lea.vmem %s3, %s563
      %p565 = pneg %p141
      %p566 = pneg %p138
      %p567 = scmp.lt.s32.totalorder %s30, 1
      %s568 = scalar_select %p567, %s30, 1
      %s569 = smul.addr %s568, 4
      %s570 = smul.addr %s569, 4
      %s571 = scalar_lea.vmem %s4, %s570
      %p572 = pneg %p167
      %p573 = pneg %p164
      %p574 = scmp.lt.s32.totalorder %s30, 1
      %s575 = scalar_select %p574, %s30, 1
      %s576 = scalar_lea.vmem %s5, %s575
      %p577 = pneg %p193
      %p578 = pneg %p190
      %p579 = scmp.lt.s32.totalorder %s30, 1
      %s580 = scalar_select %p579, %s30, 1
      %s581 = scalar_lea.vmem %s6, %s580
      %p582 = pneg %p219
      %p583 = pneg %p216
      %p584 = scmp.lt.s32.totalorder %s30, 1
      %s585 = scalar_select %p584, %s30, 1
      %s586 = scalar_lea.vmem %s7, %s585
      %p587 = pneg %p245
      %p588 = pneg %p242
      %p589 = scmp.lt.s32.totalorder %s30, 1
      %s590 = scalar_select %p589, %s30, 1
      %s591 = smul.addr %s590, 4
      %s592 = smul.addr %s591, 4
      %s593 = scalar_lea.vmem %s8, %s592
      %p594 = pneg %p271
      %p595 = pneg %p268
      %p596 = scmp.lt.s32.totalorder %s30, 1
      %s597 = scalar_select %p596, %s30, 1
      %s598 = scalar_lea.vmem %s9, %s597
      %p599 = pneg %p297
      %p600 = pneg %p294
      %p601 = pneg %p318
      %p602 = pneg %p315
      %p603 = pneg %p339
      %p604 = pneg %p336
      %p605 = pneg %p360
      %p606 = pneg %p357
      %p607 = pneg %p388
      %p608 = pneg %p385
      %p609 = scmp.lt.s32.totalorder %s30, 1
      %s610 = scalar_select %p609, %s30, 1
      %p611 = scmp.lt.s32.totalorder %s31, 1
      %s612 = scalar_select %p611, %s31, 1
      %s613 = smul.addr %s612, 2
      %s614 = smul.addr %s610, 4
      %s615 = sadd.s32 %s613, %s614
      %s616 = smul.addr %s615, 8
      %s617 = scalar_lea.vmem %s13, %s616
      %p618 = pneg %p416
      %p619 = pneg %p413
      %p620 = scmp.lt.s32.totalorder %s30, 1
      %s621 = scalar_select %p620, %s30, 1
      %p622 = scmp.lt.s32.totalorder %s31, 1
      %s623 = scalar_select %p622, %s31, 1
      %s624 = smul.addr %s623, 2
      %s625 = smul.addr %s621, 4
      %s626 = sadd.s32 %s624, %s625
      %s627 = smul.addr %s626, 8
      %s628 = scalar_lea.vmem %s14, %s627
      %p629 = scmp.lt.s32.totalorder %s30, 1
      %s630 = scalar_select %p629, %s30, 1
      %p631 = scmp.lt.s32.totalorder %s31, 1
      %s632 = scalar_select %p631, %s31, 1
      %s633 = smul.addr %s632, 2
      %s634 = smul.addr %s630, 4
      %s635 = sadd.s32 %s633, %s634
      %s636 = smul.addr %s635, 4
      %s637 = scalar_lea.vmem %s0, %s636
      %p638 = scmp.lt.s32.totalorder %s30, 1
      %s639 = scalar_select %p638, %s30, 1
      %p640 = scmp.lt.s32.totalorder %s31, 1
      %s641 = scalar_select %p640, %s31, 1
      %s642 = smul.addr %s641, 2
      %s643 = smul.addr %s639, 4
      %s644 = sadd.s32 %s642, %s643
      %s645 = smul.addr %s644, 4
      %s646 = scalar_lea.vmem %s1, %s645
      %p647 = scmp.lt.s32.totalorder %s30, 1
      %s648 = scalar_select %p647, %s30, 1
      %s649 = smul.addr %s648, 4
      %s650 = smul.addr %s649, 4
      %s651 = scalar_lea.vmem %s2, %s650
      %p652 = scmp.lt.s32.totalorder %s30, 1
      %s653 = scalar_select %p652, %s30, 1
      %s654 = smul.addr %s653, 4
      %s655 = smul.addr %s654, 4
      %s656 = scalar_lea.vmem %s3, %s655
      %p657 = scmp.lt.s32.totalorder %s30, 1
      %s658 = scalar_select %p657, %s30, 1
      %s659 = smul.addr %s658, 4
      %s660 = smul.addr %s659, 4
      %s661 = scalar_lea.vmem %s4, %s660
      %p662 = scmp.lt.s32.totalorder %s30, 1
      %s663 = scalar_select %p662, %s30, 1
      %s664 = scalar_lea.vmem %s5, %s663
      %p665 = scmp.lt.s32.totalorder %s30, 1
      %s666 = scalar_select %p665, %s30, 1
      %s667 = scalar_lea.vmem %s6, %s666
      %p668 = scmp.lt.s32.totalorder %s30, 1
      %s669 = scalar_select %p668, %s30, 1
      %s670 = scalar_lea.vmem %s7, %s669
      %p671 = scmp.lt.s32.totalorder %s30, 1
      %s672 = scalar_select %p671, %s30, 1
      %s673 = smul.addr %s672, 4
      %s674 = smul.addr %s673, 4
      %s675 = scalar_lea.vmem %s8, %s674
      %p676 = scmp.lt.s32.totalorder %s30, 1
      %s677 = scalar_select %p676, %s30, 1
      %s678 = scalar_lea.vmem %s9, %s677
      %p679 = scmp.lt.s32.totalorder %s30, 1
      %s680 = scalar_select %p679, %s30, 1
      %p681 = scmp.lt.s32.totalorder %s31, 1
      %s682 = scalar_select %p681, %s31, 1
      %s683 = smul.addr %s682, 2
      %s684 = smul.addr %s680, 4
      %s685 = sadd.s32 %s683, %s684
      %s686 = smul.addr %s685, 8
      %s687 = scalar_lea.vmem %s13, %s686
      %p688 = scmp.lt.s32.totalorder %s30, 1
      %s689 = scalar_select %p688, %s30, 1
      %p690 = scmp.lt.s32.totalorder %s31, 1
      %s691 = scalar_select %p690, %s31, 1
      %s692 = smul.addr %s691, 2
      %s693 = smul.addr %s689, 4
      %s694 = sadd.s32 %s692, %s693
      %s695 = smul.addr %s694, 8
      %s696 = scalar_lea.vmem %s14, %s695
      %v698 = vld [vmem:[%s637] sm:$0xf]
      %v699 = vld [vmem:[%s637 + $0x4] sm:$0xf]
      %v700 = vld [vmem:[%s646] sm:$0xf]
      %v701 = vld [vmem:[%s646 + $0x4] sm:$0xf]
      %v702 = vld [vmem:[%s651] sm:$0xf]
      %v703 = vld [vmem:[%s651 + $0x4] sm:$0xf]
      %v704 = vld [vmem:[%s651 + $0x8] sm:$0xf]
      %v705 = vld [vmem:[%s651 + $0xc] sm:$0xf]
      %v706 = vld [vmem:[%s664] sm:$0x1]
      %v708 = vlaneseq
      %v709 = vshrl.u32 %v708, 7
      %v710 = vsub.s32 0, %v709
      %v711 = vrot.slane %v706, %v710
      %v715 = vunpack.c.l.b16 %v698
      %v716 = vunpack.c.l.b16 %v699
      %v717 = vpack.c.b16 %v716, %v715
      %v722 = vunpack.c.l.b16 %v702
      %v723 = vunpack.c.l.b16 %v703
      %v724 = vunpack.c.l.b16 %v704
      %v725 = vunpack.c.l.b16 %v705
      %v726 = vpack.c.b16 %v723, %v722
      %v727 = vpack.c.b16 %v725, %v724
      %vm730 = vcmask 261120
      %v732 = vsel %vm730, %v717, 0
      %734 = vmatprep.subr.bf16.mxu0 0
      %735 = vmatpush1.bf16.msra.mxu0 %v726
      %736 = vmatprep.subr.bf16.mxu0 0
      %737 = vmatpush1.bf16.msra.mxu0 %v727
      %738 = vmatprep.subr.bf16.mxu0 0
      %739 = vmatpush1.bf16.msra.mxu0 0
      %740 = vmatprep.subr.bf16.mxu0 0
      %741 = vmatpush1.bf16.msra.mxu0 0
      %742 = vmatprep.subr.bf16.mxu0 0
      %743 = vmatpush1.bf16.msra.mxu0 0
      %744 = vmatprep.subr.bf16.mxu0 0
      %745 = vmatpush1.bf16.msra.mxu0 0
      %746 = vmatprep.subr.bf16.mxu0 0
      %747 = vmatpush1.bf16.msra.mxu0 0
      %748 = vmatprep.subr.bf16.mxu0 0
      %749 = vmatpush1.bf16.msra.mxu0 0
      %750 = vmatprep.subr.bf16.mxu0 0
      %751 = vmatpush1.bf16.msra.mxu0 0
      %752 = vmatprep.subr.bf16.mxu0 0
      %753 = vmatpush1.bf16.msra.mxu0 0
      %754 = vmatprep.subr.bf16.mxu0 0
      %755 = vmatpush1.bf16.msra.mxu0 0
      %756 = vmatprep.subr.bf16.mxu0 0
      %757 = vmatpush1.bf16.msra.mxu0 0
      %758 = vmatprep.subr.bf16.mxu0 0
      %759 = vmatpush1.bf16.msra.mxu0 0
      %760 = vmatprep.subr.bf16.mxu0 0
      %761 = vmatpush1.bf16.msra.mxu0 0
      %762 = vmatprep.subr.bf16.mxu0 0
      %763 = vmatpush1.bf16.msra.mxu0 0
      %764 = vmatprep.subr.bf16.mxu0 0
      %765 = vmatpush1.bf16.msra.mxu0 0
      %766 = vmatprep.mubr.bf16.mxu0 0
      %767 = vmatmul.mubr.bf16.gmra.mrb[0].mxu0 %v732
      %v768 = vpop.f32.mrb[0].mxu0
      %v769 = vadd.f32 %v711, %v768
      %v770 = vpop.f32.mrb[0].mxu0
      %v771 = vpop.f32.mrb[0].mxu0
      %v772 = vadd.f32 %v711, %v771
      %v773 = vpop.f32.mrb[0].mxu0
      %774 = vdwg.mxu0
      %v775 = vpack.c.bf16 %v772, %v769
      %v776 = vld [vmem:[%s656] sm:$0xf]
      %v777 = vld [vmem:[%s656 + $0x4] sm:$0xf]
      %v778 = vld [vmem:[%s656 + $0x8] sm:$0xf]
      %v779 = vld [vmem:[%s656 + $0xc] sm:$0xf]
      %v780 = vld [vmem:[%s667] sm:$0x1]
      %v782 = vlaneseq
      %v783 = vshrl.u32 %v782, 7
      %v784 = vsub.s32 0, %v783
      %v785 = vrot.slane %v780, %v784
      %v789 = vunpack.c.l.b16 %v700
      %v790 = vunpack.c.l.b16 %v701
      %v791 = vpack.c.b16 %v790, %v789
      %v796 = vunpack.c.l.b16 %v776
      %v797 = vunpack.c.l.b16 %v777
      %v798 = vunpack.c.l.b16 %v778
      %v799 = vunpack.c.l.b16 %v779
      %v800 = vpack.c.b16 %v797, %v796
      %v801 = vpack.c.b16 %v799, %v798
      %v805 = vsel %vm730, %v791, 0
      %807 = vmatprep.subr.bf16.mxu0 0
      %808 = vmatpush1.bf16.msra.mxu0 %v800
      %809 = vmatprep.subr.bf16.mxu0 0
      %810 = vmatpush1.bf16.msra.mxu0 %v801
      %811 = vmatprep.subr.bf16.mxu0 0
      %812 = vmatpush1.bf16.msra.mxu0 0
      %813 = vmatprep.subr.bf16.mxu0 0
      %814 = vmatpush1.bf16.msra.mxu0 0
      %815 = vmatprep.subr.bf16.mxu0 0
      %816 = vmatpush1.bf16.msra.mxu0 0
      %817 = vmatprep.subr.bf16.mxu0 0
      %818 = vmatpush1.bf16.msra.mxu0 0
      %819 = vmatprep.subr.bf16.mxu0 0
      %820 = vmatpush1.bf16.msra.mxu0 0
      %821 = vmatprep.subr.bf16.mxu0 0
      %822 = vmatpush1.bf16.msra.mxu0 0
      %823 = vmatprep.subr.bf16.mxu0 0
      %824 = vmatpush1.bf16.msra.mxu0 0
      %825 = vmatprep.subr.bf16.mxu0 0
      %826 = vmatpush1.bf16.msra.mxu0 0
      %827 = vmatprep.subr.bf16.mxu0 0
      %828 = vmatpush1.bf16.msra.mxu0 0
      %829 = vmatprep.subr.bf16.mxu0 0
      %830 = vmatpush1.bf16.msra.mxu0 0
      %831 = vmatprep.subr.bf16.mxu0 0
      %832 = vmatpush1.bf16.msra.mxu0 0
      %833 = vmatprep.subr.bf16.mxu0 0
      %834 = vmatpush1.bf16.msra.mxu0 0
      %835 = vmatprep.subr.bf16.mxu0 0
      %836 = vmatpush1.bf16.msra.mxu0 0
      %837 = vmatprep.subr.bf16.mxu0 0
      %838 = vmatpush1.bf16.msra.mxu0 0
      %839 = vmatprep.mubr.bf16.mxu0 0
      %840 = vmatmul.mubr.bf16.gmra.mrb[0].mxu0 %v805
      %v841 = vpop.f32.mrb[0].mxu0
      %v842 = vadd.f32 %v785, %v841
      %v843 = vpop.f32.mrb[0].mxu0
      %v844 = vpop.f32.mrb[0].mxu0
      %v845 = vadd.f32 %v785, %v844
      %v846 = vpop.f32.mrb[0].mxu0
      %847 = vdwg.mxu0
      %v848 = vpack.c.bf16 %v845, %v842
      %v849 = vld [vmem:[%s661] sm:$0xf]
      %v850 = vld [vmem:[%s661 + $0x4] sm:$0xf]
      %v851 = vld [vmem:[%s661 + $0x8] sm:$0xf]
      %v852 = vld [vmem:[%s661 + $0xc] sm:$0xf]
      %v853 = vld [vmem:[%s670] sm:$0x1]
      %v855 = vlaneseq
      %v856 = vshrl.u32 %v855, 7
      %v857 = vsub.s32 0, %v856
      %v858 = vrot.slane %v853, %v857
      %v864 = vunpack.c.l.b16 %v849
      %v865 = vunpack.c.l.b16 %v850
      %v866 = vunpack.c.l.b16 %v851
      %v867 = vunpack.c.l.b16 %v852
      %v868 = vpack.c.b16 %v865, %v864
      %v869 = vpack.c.b16 %v867, %v866
      %872 = vmatprep.subr.bf16.mxu0 0
      %873 = vmatpush1.bf16.msra.mxu0 %v868
      %874 = vmatprep.subr.bf16.mxu0 0
      %875 = vmatpush1.bf16.msra.mxu0 %v869
      %876 = vmatprep.subr.bf16.mxu0 0
      %877 = vmatpush1.bf16.msra.mxu0 0
      %878 = vmatprep.subr.bf16.mxu0 0
      %879 = vmatpush1.bf16.msra.mxu0 0
      %880 = vmatprep.subr.bf16.mxu0 0
      %881 = vmatpush1.bf16.msra.mxu0 0
      %882 = vmatprep.subr.bf16.mxu0 0
      %883 = vmatpush1.bf16.msra.mxu0 0
      %884 = vmatprep.subr.bf16.mxu0 0
      %885 = vmatpush1.bf16.msra.mxu0 0
      %886 = vmatprep.subr.bf16.mxu0 0
      %887 = vmatpush1.bf16.msra.mxu0 0
      %888 = vmatprep.subr.bf16.mxu0 0
      %889 = vmatpush1.bf16.msra.mxu0 0
      %890 = vmatprep.subr.bf16.mxu0 0
      %891 = vmatpush1.bf16.msra.mxu0 0
      %892 = vmatprep.subr.bf16.mxu0 0
      %893 = vmatpush1.bf16.msra.mxu0 0
      %894 = vmatprep.subr.bf16.mxu0 0
      %895 = vmatpush1.bf16.msra.mxu0 0
      %896 = vmatprep.subr.bf16.mxu0 0
      %897 = vmatpush1.bf16.msra.mxu0 0
      %898 = vmatprep.subr.bf16.mxu0 0
      %899 = vmatpush1.bf16.msra.mxu0 0
      %900 = vmatprep.subr.bf16.mxu0 0
      %901 = vmatpush1.bf16.msra.mxu0 0
      %902 = vmatprep.subr.bf16.mxu0 0
      %903 = vmatpush1.bf16.msra.mxu0 0
      %904 = vmatprep.mubr.bf16.mxu0 0
      %905 = vmatmul.mubr.bf16.gmra.mrb[0].mxu0 %v805
      %v906 = vpop.f32.mrb[0].mxu0
      %v907 = vadd.f32 %v858, %v906
      %v908 = vpop.f32.mrb[0].mxu0
      %v909 = vpop.f32.mrb[0].mxu0
      %v910 = vadd.f32 %v858, %v909
      %v911 = vpop.f32.mrb[0].mxu0
      %912 = vdwg.mxu0
      %v913 = vpack.c.bf16 %v910, %v907
      %p914 = scmp.eq.s32.totalorder %s30, 0
      %s915 = scalar_select %p914, 16, 8
      %v916 = vlaneseq
      %v917 = vand.u32 %v916, 127
      %v918 = vstv %s915
      %vm919 = vcmp.lt.s32.totalorder %v917, %v918
      %vm920 = vcmask 64512
      %v922 = vsel %vm920, %v775, 0
      %v925 = vsel %vm920, %v848, 0
      %927 = vmatprep.subr.bf16.mxu0 0
      %928 = vmatpush1.bf16.xpose.msra.mxu0 %v925
      %929 = vmatprep.subr.bf16.mxu0 0
      %930 = vmatpush1.bf16.xpose.msra.mxu0 0
      %931 = vmatprep.subr.bf16.mxu0 0
      %932 = vmatpush1.bf16.xpose.msra.mxu0 0
      %933 = vmatprep.subr.bf16.mxu0 0
      %934 = vmatpush1.bf16.xpose.msra.mxu0 0
      %935 = vmatprep.subr.bf16.mxu0 0
      %936 = vmatpush1.bf16.xpose.msra.mxu0 0
      %937 = vmatprep.subr.bf16.mxu0 0
      %938 = vmatpush1.bf16.xpose.msra.mxu0 0
      %939 = vmatprep.subr.bf16.mxu0 0
      %940 = vmatpush1.bf16.xpose.msra.mxu0 0
      %941 = vmatprep.subr.bf16.mxu0 0
      %942 = vmatpush1.bf16.xpose.msra.mxu0 0
      %943 = vmatprep.subr.bf16.mxu0 0
      %944 = vmatpush1.bf16.xpose.msra.mxu0 0
      %945 = vmatprep.subr.bf16.mxu0 0
      %946 = vmatpush1.bf16.xpose.msra.mxu0 0
      %947 = vmatprep.subr.bf16.mxu0 0
      %948 = vmatpush1.bf16.xpose.msra.mxu0 0
      %949 = vmatprep.subr.bf16.mxu0 0
      %950 = vmatpush1.bf16.xpose.msra.mxu0 0
      %951 = vmatprep.subr.bf16.mxu0 0
      %952 = vmatpush1.bf16.xpose.msra.mxu0 0
      %953 = vmatprep.subr.bf16.mxu0 0
      %954 = vmatpush1.bf16.xpose.msra.mxu0 0
      %955 = vmatprep.subr.bf16.mxu0 0
      %956 = vmatpush1.bf16.xpose.msra.mxu0 0
      %957 = vmatprep.subr.bf16.mxu0 0
      %958 = vmatpush1.bf16.xpose.msra.mxu0 0
      %959 = vmatprep.mubr.bf16.mxu0 0
      %960 = vmatmul.mubr.bf16.gmra.mrb[0].mxu0 %v922
      %v961 = vpop.f32.mrb[0].mxu0
      %v962 = vadd.f32 0.0, %v961
      %v963 = vpop.f32.mrb[0].mxu0
      %v964 = vpop.f32.mrb[0].mxu0
      %v965 = vadd.f32 0.0, %v964
      %v966 = vpop.f32.mrb[0].mxu0
      %967 = vdwg.mxu0
      %v968 = vmul.f32 %v962, 0.35355338
      %v969 = vmul.f32 %v965, 0.35355338
      %v970 = vsel %vm919, %v968, -1e+30
      %v971 = vsel %vm919, %v969, -1e+30
      %vm972 = vcmask 130048
      %v973 = vsel %vm972, %v970, -inf
      %974 = vmax.xlane.f32.xlu0 %v973
      %v975 = vpop.xlane.xlu0 %974
      %v976 = vsel %vm972, %v971, -inf
      %977 = vmax.xlane.f32.xlu0 %v976
      %v978 = vpop.xlane.xlu0 %977
      %v979 = vsub.f32 %v970, %v975
      %v980 = vsub.f32 %v971, %v978
      %v981 = vmul.f32 %v979, 1.442695
      %v982 = vpow.pop %v981
      %v983 = vmul.f32 %v980, 1.442695
      %v984 = vpow.pop %v983
      %v985 = vsel %vm972, %v982, 0.0
      %986 = vadd.xlane.f32.xlu0 %v985
      %v987 = vpop.xlane.xlu0 %986
      %v988 = vsel %vm972, %v984, 0.0
      %989 = vadd.xlane.f32.xlu0 %v988
      %v990 = vpop.xlane.xlu0 %989
      %v991 = vrcp.pop %v987
      %v992 = vmul.f32 %v982, %v991
      %v993 = vrcp.pop %v990
      %v994 = vmul.f32 %v984, %v993
      %v995 = vadd.f32 %v992, 0.0
      %v996 = vadd.f32 %v994, 0.0
      %v997 = vpack.c.bf16 %v994, %v992
      %v999 = vsel %vm972, %v997, 0
      %1001 = vmatprep.subr.bf16.mxu0 0
      %1002 = vmatpush1.bf16.msra.mxu0 %v913
      %1003 = vmatprep.subr.bf16.mxu0 0
      %1004 = vmatpush1.bf16.msra.mxu0 0
      %1005 = vmatprep.subr.bf16.mxu0 0
      %1006 = vmatpush1.bf16.msra.mxu0 0
      %1007 = vmatprep.subr.bf16.mxu0 0
      %1008 = vmatpush1.bf16.msra.mxu0 0
      %1009 = vmatprep.subr.bf16.mxu0 0
      %1010 = vmatpush1.bf16.msra.mxu0 0
      %1011 = vmatprep.subr.bf16.mxu0 0
      %1012 = vmatpush1.bf16.msra.mxu0 0
      %1013 = vmatprep.subr.bf16.mxu0 0
      %1014 = vmatpush1.bf16.msra.mxu0 0
      %1015 = vmatprep.subr.bf16.mxu0 0
      %1016 = vmatpush1.bf16.msra.mxu0 0
      %1017 = vmatprep.subr.bf16.mxu0 0
      %1018 = vmatpush1.bf16.msra.mxu0 0
      %1019 = vmatprep.subr.bf16.mxu0 0
      %1020 = vmatpush1.bf16.msra.mxu0 0
      %1021 = vmatprep.subr.bf16.mxu0 0
      %1022 = vmatpush1.bf16.msra.mxu0 0
      %1023 = vmatprep.subr.bf16.mxu0 0
      %1024 = vmatpush1.bf16.msra.mxu0 0
      %1025 = vmatprep.subr.bf16.mxu0 0
      %1026 = vmatpush1.bf16.msra.mxu0 0
      %1027 = vmatprep.subr.bf16.mxu0 0
      %1028 = vmatpush1.bf16.msra.mxu0 0
      %1029 = vmatprep.subr.bf16.mxu0 0
      %1030 = vmatpush1.bf16.msra.mxu0 0
      %1031 = vmatprep.subr.bf16.mxu0 0
      %1032 = vmatpush1.bf16.msra.mxu0 0
      %1033 = vmatprep.mubr.bf16.mxu0 0
      %1034 = vmatmul.mubr.bf16.gmra.mrb[0].mxu0 %v999
      %v1035 = vpop.f32.mrb[0].mxu0
      %v1036 = vadd.f32 0.0, %v1035
      %v1037 = vpop.f32.mrb[0].mxu0
      %v1038 = vpop.f32.mrb[0].mxu0
      %v1039 = vadd.f32 0.0, %v1038
      %v1040 = vpop.f32.mrb[0].mxu0
      %1041 = vdwg.mxu0
      %v1042 = vpack.c.bf16 %v1039, %v1036
      %1044 = vrot.lane.b32.xlu0 %v775, 120
      %v1045 = vpop.permute.xlu0 %1044
      %1047 = vrot.lane.b32.xlu0 %v848, 120
      %v1048 = vpop.permute.xlu0 %1047
      %v1050 = vsel %vm920, %v1045, 0
      %v1053 = vsel %vm920, %v1048, 0
      %1055 = vmatprep.subr.bf16.mxu0 0
      %1056 = vmatpush1.bf16.xpose.msra.mxu0 %v1053
      %1057 = vmatprep.subr.bf16.mxu0 0
      %1058 = vmatpush1.bf16.xpose.msra.mxu0 0
      %1059 = vmatprep.subr.bf16.mxu0 0
      %1060 = vmatpush1.bf16.xpose.msra.mxu0 0
      %1061 = vmatprep.subr.bf16.mxu0 0
      %1062 = vmatpush1.bf16.xpose.msra.mxu0 0
      %1063 = vmatprep.subr.bf16.mxu0 0
      %1064 = vmatpush1.bf16.xpose.msra.mxu0 0
      %1065 = vmatprep.subr.bf16.mxu0 0
      %1066 = vmatpush1.bf16.xpose.msra.mxu0 0
      %1067 = vmatprep.subr.bf16.mxu0 0
      %1068 = vmatpush1.bf16.xpose.msra.mxu0 0
      %1069 = vmatprep.subr.bf16.mxu0 0
      %1070 = vmatpush1.bf16.xpose.msra.mxu0 0
      %1071 = vmatprep.subr.bf16.mxu0 0
      %1072 = vmatpush1.bf16.xpose.msra.mxu0 0
      %1073 = vmatprep.subr.bf16.mxu0 0
      %1074 = vmatpush1.bf16.xpose.msra.mxu0 0
      %1075 = vmatprep.subr.bf16.mxu0 0
      %1076 = vmatpush1.bf16.xpose.msra.mxu0 0
      %1077 = vmatprep.subr.bf16.mxu0 0
      %1078 = vmatpush1.bf16.xpose.msra.mxu0 0
      %1079 = vmatprep.subr.bf16.mxu0 0
      %1080 = vmatpush1.bf16.xpose.msra.mxu0 0
      %1081 = vmatprep.subr.bf16.mxu0 0
      %1082 = vmatpush1.bf16.xpose.msra.mxu0 0
      %1083 = vmatprep.subr.bf16.mxu0 0
      %1084 = vmatpush1.bf16.xpose.msra.mxu0 0
      %1085 = vmatprep.subr.bf16.mxu0 0
      %1086 = vmatpush1.bf16.xpose.msra.mxu0 0
      %1087 = vmatprep.mubr.bf16.mxu0 0
      %1088 = vmatmul.mubr.bf16.gmra.mrb[0].mxu0 %v1050
      %v1089 = vpop.f32.mrb[0].mxu0
      %v1090 = vadd.f32 0.0, %v1089
      %v1091 = vpop.f32.mrb[0].mxu0
      %v1092 = vpop.f32.mrb[0].mxu0
      %v1093 = vadd.f32 0.0, %v1092
      %v1094 = vpop.f32.mrb[0].mxu0
      %1095 = vdwg.mxu0
      %v1096 = vmul.f32 %v1090, 0.35355338
      %v1097 = vmul.f32 %v1093, 0.35355338
      %v1098 = vsel %vm919, %v1096, -1e+30
      %v1099 = vsel %vm919, %v1097, -1e+30
      %v1100 = vsel %vm972, %v1098, -inf
      %1101 = vmax.xlane.f32.xlu0 %v1100
      %v1102 = vpop.xlane.xlu0 %1101
      %v1103 = vsel %vm972, %v1099, -inf
      %1104 = vmax.xlane.f32.xlu0 %v1103
      %v1105 = vpop.xlane.xlu0 %1104
      %v1106 = vsub.f32 %v1098, %v1102
      %v1107 = vsub.f32 %v1099, %v1105
      %v1108 = vmul.f32 %v1106, 1.442695
      %v1109 = vpow.pop %v1108
      %v1110 = vmul.f32 %v1107, 1.442695
      %v1111 = vpow.pop %v1110
      %v1112 = vsel %vm972, %v1109, 0.0
      %1113 = vadd.xlane.f32.xlu0 %v1112
      %v1114 = vpop.xlane.xlu0 %1113
      %v1115 = vsel %vm972, %v1111, 0.0
      %1116 = vadd.xlane.f32.xlu0 %v1115
      %v1117 = vpop.xlane.xlu0 %1116
      %v1118 = vrcp.pop %v1114
      %v1119 = vmul.f32 %v1109, %v1118
      %v1120 = vrcp.pop %v1117
      %v1121 = vmul.f32 %v1111, %v1120
      %v1122 = vadd.f32 %v995, %v1119
      %v1123 = vadd.f32 %v996, %v1121
      %v1124 = vpack.c.bf16 %v1121, %v1119
      %1126 = vrot.lane.b32.xlu0 %v913, 120
      %v1127 = vpop.permute.xlu0 %1126
      %v1130 = vsel %vm972, %v1124, 0
      %1132 = vmatprep.subr.bf16.mxu0 0
      %1133 = vmatpush1.bf16.msra.mxu0 %v1127
      %1134 = vmatprep.subr.bf16.mxu0 0
      %1135 = vmatpush1.bf16.msra.mxu0 0
      %1136 = vmatprep.subr.bf16.mxu0 0
      %1137 = vmatpush1.bf16.msra.mxu0 0
      %1138 = vmatprep.subr.bf16.mxu0 0
      %1139 = vmatpush1.bf16.msra.mxu0 0
      %1140 = vmatprep.subr.bf16.mxu0 0
      %1141 = vmatpush1.bf16.msra.mxu0 0
      %1142 = vmatprep.subr.bf16.mxu0 0
      %1143 = vmatpush1.bf16.msra.mxu0 0
      %1144 = vmatprep.subr.bf16.mxu0 0
      %1145 = vmatpush1.bf16.msra.mxu0 0
      %1146 = vmatprep.subr.bf16.mxu0 0
      %1147 = vmatpush1.bf16.msra.mxu0 0
      %1148 = vmatprep.subr.bf16.mxu0 0
      %1149 = vmatpush1.bf16.msra.mxu0 0
      %1150 = vmatprep.subr.bf16.mxu0 0
      %1151 = vmatpush1.bf16.msra.mxu0 0
      %1152 = vmatprep.subr.bf16.mxu0 0
      %1153 = vmatpush1.bf16.msra.mxu0 0
      %1154 = vmatprep.subr.bf16.mxu0 0
      %1155 = vmatpush1.bf16.msra.mxu0 0
      %1156 = vmatprep.subr.bf16.mxu0 0
      %1157 = vmatpush1.bf16.msra.mxu0 0
      %1158 = vmatprep.subr.bf16.mxu0 0
      %1159 = vmatpush1.bf16.msra.mxu0 0
      %1160 = vmatprep.subr.bf16.mxu0 0
      %1161 = vmatpush1.bf16.msra.mxu0 0
      %1162 = vmatprep.subr.bf16.mxu0 0
      %1163 = vmatpush1.bf16.msra.mxu0 0
      %1164 = vmatprep.mubr.bf16.mxu0 0
      %1165 = vmatmul.mubr.bf16.gmra.mrb[0].mxu0 %v1130
      %v1166 = vpop.f32.mrb[0].mxu0
      %v1167 = vadd.f32 0.0, %v1166
      %v1168 = vpop.f32.mrb[0].mxu0
      %v1169 = vpop.f32.mrb[0].mxu0
      %v1170 = vadd.f32 0.0, %v1169
      %v1171 = vpop.f32.mrb[0].mxu0
      %1172 = vdwg.mxu0
      %v1173 = vpack.c.bf16 %v1170, %v1167
      %1174 = vrot.lane.b32.xlu0 %v775, 112
      %v1175 = vpop.permute.xlu0 %1174
      %1176 = vrot.lane.b32.xlu0 %v848, 112
      %v1177 = vpop.permute.xlu0 %1176
      %v1179 = vsel %vm920, %v1175, 0
      %v1182 = vsel %vm920, %v1177, 0
      %1184 = vmatprep.subr.bf16.mxu0 0
      %1185 = vmatpush1.bf16.xpose.msra.mxu0 %v1182
      %1186 = vmatprep.subr.bf16.mxu0 0
      %1187 = vmatpush1.bf16.xpose.msra.mxu0 0
      %1188 = vmatprep.subr.bf16.mxu0 0
      %1189 = vmatpush1.bf16.xpose.msra.mxu0 0
      %1190 = vmatprep.subr.bf16.mxu0 0
      %1191 = vmatpush1.bf16.xpose.msra.mxu0 0
      %1192 = vmatprep.subr.bf16.mxu0 0
      %1193 = vmatpush1.bf16.xpose.msra.mxu0 0
      %1194 = vmatprep.subr.bf16.mxu0 0
      %1195 = vmatpush1.bf16.xpose.msra.mxu0 0
      %1196 = vmatprep.subr.bf16.mxu0 0
      %1197 = vmatpush1.bf16.xpose.msra.mxu0 0
      %1198 = vmatprep.subr.bf16.mxu0 0
      %1199 = vmatpush1.bf16.xpose.msra.mxu0 0
      %1200 = vmatprep.subr.bf16.mxu0 0
      %1201 = vmatpush1.bf16.xpose.msra.mxu0 0
      %1202 = vmatprep.subr.bf16.mxu0 0
      %1203 = vmatpush1.bf16.xpose.msra.mxu0 0
      %1204 = vmatprep.subr.bf16.mxu0 0
      %1205 = vmatpush1.bf16.xpose.msra.mxu0 0
      %1206 = vmatprep.subr.bf16.mxu0 0
      %1207 = vmatpush1.bf16.xpose.msra.mxu0 0
      %1208 = vmatprep.subr.bf16.mxu0 0
      %1209 = vmatpush1.bf16.xpose.msra.mxu0 0
      %1210 = vmatprep.subr.bf16.mxu0 0
      %1211 = vmatpush1.bf16.xpose.msra.mxu0 0
      %1212 = vmatprep.subr.bf16.mxu0 0
      %1213 = vmatpush1.bf16.xpose.msra.mxu0 0
      %1214 = vmatprep.subr.bf16.mxu0 0
      %1215 = vmatpush1.bf16.xpose.msra.mxu0 0
      %1216 = vmatprep.mubr.bf16.mxu0 0
      %1217 = vmatmul.mubr.bf16.gmra.mrb[0].mxu0 %v1179
      %v1218 = vpop.f32.mrb[0].mxu0
      %v1219 = vadd.f32 0.0, %v1218
      %v1220 = vpop.f32.mrb[0].mxu0
      %v1221 = vpop.f32.mrb[0].mxu0
      %v1222 = vadd.f32 0.0, %v1221
      %v1223 = vpop.f32.mrb[0].mxu0
      %1224 = vdwg.mxu0
      %v1225 = vmul.f32 %v1219, 0.35355338
      %v1226 = vmul.f32 %v1222, 0.35355338
      %v1227 = vsel %vm919, %v1225, -1e+30
      %v1228 = vsel %vm919, %v1226, -1e+30
      %v1229 = vsel %vm972, %v1227, -inf
      %1230 = vmax.xlane.f32.xlu0 %v1229
      %v1231 = vpop.xlane.xlu0 %1230
      %v1232 = vsel %vm972, %v1228, -inf
      %1233 = vmax.xlane.f32.xlu0 %v1232
      %v1234 = vpop.xlane.xlu0 %1233
      %v1235 = vsub.f32 %v1227, %v1231
      %v1236 = vsub.f32 %v1228, %v1234
      %v1237 = vmul.f32 %v1235, 1.442695
      %v1238 = vpow.pop %v1237
      %v1239 = vmul.f32 %v1236, 1.442695
      %v1240 = vpow.pop %v1239
      %v1241 = vsel %vm972, %v1238, 0.0
      %1242 = vadd.xlane.f32.xlu0 %v1241
      %v1243 = vpop.xlane.xlu0 %1242
      %v1244 = vsel %vm972, %v1240, 0.0
      %1245 = vadd.xlane.f32.xlu0 %v1244
      %v1246 = vpop.xlane.xlu0 %1245
      %v1247 = vrcp.pop %v1243
      %v1248 = vmul.f32 %v1238, %v1247
      %v1249 = vrcp.pop %v1246
      %v1250 = vmul.f32 %v1240, %v1249
      %v1251 = vadd.f32 %v1122, %v1248
      %v1252 = vadd.f32 %v1123, %v1250
      %v1253 = vpack.c.bf16 %v1250, %v1248
      %1254 = vrot.lane.b32.xlu0 %v913, 112
      %v1255 = vpop.permute.xlu0 %1254
      %v1258 = vsel %vm972, %v1253, 0
      %1260 = vmatprep.subr.bf16.mxu0 0
      %1261 = vmatpush1.bf16.msra.mxu0 %v1255
      %1262 = vmatprep.subr.bf16.mxu0 0
      %1263 = vmatpush1.bf16.msra.mxu0 0
      %1264 = vmatprep.subr.bf16.mxu0 0
      %1265 = vmatpush1.bf16.msra.mxu0 0
      %1266 = vmatprep.subr.bf16.mxu0 0
      %1267 = vmatpush1.bf16.msra.mxu0 0
      %1268 = vmatprep.subr.bf16.mxu0 0
      %1269 = vmatpush1.bf16.msra.mxu0 0
      %1270 = vmatprep.subr.bf16.mxu0 0
      %1271 = vmatpush1.bf16.msra.mxu0 0
      %1272 = vmatprep.subr.bf16.mxu0 0
      %1273 = vmatpush1.bf16.msra.mxu0 0
      %1274 = vmatprep.subr.bf16.mxu0 0
      %1275 = vmatpush1.bf16.msra.mxu0 0
      %1276 = vmatprep.subr.bf16.mxu0 0
      %1277 = vmatpush1.bf16.msra.mxu0 0
      %1278 = vmatprep.subr.bf16.mxu0 0
      %1279 = vmatpush1.bf16.msra.mxu0 0
      %1280 = vmatprep.subr.bf16.mxu0 0
      %1281 = vmatpush1.bf16.msra.mxu0 0
      %1282 = vmatprep.subr.bf16.mxu0 0
      %1283 = vmatpush1.bf16.msra.mxu0 0
      %1284 = vmatprep.subr.bf16.mxu0 0
      %1285 = vmatpush1.bf16.msra.mxu0 0
      %1286 = vmatprep.subr.bf16.mxu0 0
      %1287 = vmatpush1.bf16.msra.mxu0 0
      %1288 = vmatprep.subr.bf16.mxu0 0
      %1289 = vmatpush1.bf16.msra.mxu0 0
      %1290 = vmatprep.subr.bf16.mxu0 0
      %1291 = vmatpush1.bf16.msra.mxu0 0
      %1292 = vmatprep.mubr.bf16.mxu0 0
      %1293 = vmatmul.mubr.bf16.gmra.mrb[0].mxu0 %v1258
      %v1294 = vpop.f32.mrb[0].mxu0
      %v1295 = vadd.f32 0.0, %v1294
      %v1296 = vpop.f32.mrb[0].mxu0
      %v1297 = vpop.f32.mrb[0].mxu0
      %v1298 = vadd.f32 0.0, %v1297
      %v1299 = vpop.f32.mrb[0].mxu0
      %1300 = vdwg.mxu0
      %v1301 = vpack.c.bf16 %v1298, %v1295
      %1302 = vrot.lane.b32.xlu0 %v775, 104
      %v1303 = vpop.permute.xlu0 %1302
      %1304 = vrot.lane.b32.xlu0 %v848, 104
      %v1305 = vpop.permute.xlu0 %1304
      %v1307 = vsel %vm920, %v1303, 0
      %v1310 = vsel %vm920, %v1305, 0
      %1312 = vmatprep.subr.bf16.mxu0 0
      %1313 = vmatpush1.bf16.xpose.msra.mxu0 %v1310
      %1314 = vmatprep.subr.bf16.mxu0 0
      %1315 = vmatpush1.bf16.xpose.msra.mxu0 0
      %1316 = vmatprep.subr.bf16.mxu0 0
      %1317 = vmatpush1.bf16.xpose.msra.mxu0 0
      %1318 = vmatprep.subr.bf16.mxu0 0
      %1319 = vmatpush1.bf16.xpose.msra.mxu0 0
      %1320 = vmatprep.subr.bf16.mxu0 0
      %1321 = vmatpush1.bf16.xpose.msra.mxu0 0
      %1322 = vmatprep.subr.bf16.mxu0 0
      %1323 = vmatpush1.bf16.xpose.msra.mxu0 0
      %1324 = vmatprep.subr.bf16.mxu0 0
      %1325 = vmatpush1.bf16.xpose.msra.mxu0 0
      %1326 = vmatprep.subr.bf16.mxu0 0
      %1327 = vmatpush1.bf16.xpose.msra.mxu0 0
      %1328 = vmatprep.subr.bf16.mxu0 0
      %1329 = vmatpush1.bf16.xpose.msra.mxu0 0
      %1330 = vmatprep.subr.bf16.mxu0 0
      %1331 = vmatpush1.bf16.xpose.msra.mxu0 0
      %1332 = vmatprep.subr.bf16.mxu0 0
      %1333 = vmatpush1.bf16.xpose.msra.mxu0 0
      %1334 = vmatprep.subr.bf16.mxu0 0
      %1335 = vmatpush1.bf16.xpose.msra.mxu0 0
      %1336 = vmatprep.subr.bf16.mxu0 0
      %1337 = vmatpush1.bf16.xpose.msra.mxu0 0
      %1338 = vmatprep.subr.bf16.mxu0 0
      %1339 = vmatpush1.bf16.xpose.msra.mxu0 0
      %1340 = vmatprep.subr.bf16.mxu0 0
      %1341 = vmatpush1.bf16.xpose.msra.mxu0 0
      %1342 = vmatprep.subr.bf16.mxu0 0
      %1343 = vmatpush1.bf16.xpose.msra.mxu0 0
      %1344 = vmatprep.mubr.bf16.mxu0 0
      %1345 = vmatmul.mubr.bf16.gmra.mrb[0].mxu0 %v1307
      %v1346 = vpop.f32.mrb[0].mxu0
      %v1347 = vadd.f32 0.0, %v1346
      %v1348 = vpop.f32.mrb[0].mxu0
      %v1349 = vpop.f32.mrb[0].mxu0
      %v1350 = vadd.f32 0.0, %v1349
      %v1351 = vpop.f32.mrb[0].mxu0
      %1352 = vdwg.mxu0
      %v1353 = vmul.f32 %v1347, 0.35355338
      %v1354 = vmul.f32 %v1350, 0.35355338
      %v1355 = vsel %vm919, %v1353, -1e+30
      %v1356 = vsel %vm919, %v1354, -1e+30
      %v1357 = vsel %vm972, %v1355, -inf
      %1358 = vmax.xlane.f32.xlu0 %v1357
      %v1359 = vpop.xlane.xlu0 %1358
      %v1360 = vsel %vm972, %v1356, -inf
      %1361 = vmax.xlane.f32.xlu0 %v1360
      %v1362 = vpop.xlane.xlu0 %1361
      %v1363 = vsub.f32 %v1355, %v1359
      %v1364 = vsub.f32 %v1356, %v1362
      %v1365 = vmul.f32 %v1363, 1.442695
      %v1366 = vpow.pop %v1365
      %v1367 = vmul.f32 %v1364, 1.442695
      %v1368 = vpow.pop %v1367
      %v1369 = vsel %vm972, %v1366, 0.0
      %1370 = vadd.xlane.f32.xlu0 %v1369
      %v1371 = vpop.xlane.xlu0 %1370
      %v1372 = vsel %vm972, %v1368, 0.0
      %1373 = vadd.xlane.f32.xlu0 %v1372
      %v1374 = vpop.xlane.xlu0 %1373
      %v1375 = vrcp.pop %v1371
      %v1376 = vmul.f32 %v1366, %v1375
      %v1377 = vrcp.pop %v1374
      %v1378 = vmul.f32 %v1368, %v1377
      %v1379 = vadd.f32 %v1251, %v1376
      %v1380 = vadd.f32 %v1252, %v1378
      %v1381 = vpack.c.bf16 %v1378, %v1376
      %1382 = vrot.lane.b32.xlu0 %v913, 104
      %v1383 = vpop.permute.xlu0 %1382
      %v1386 = vsel %vm972, %v1381, 0
      %1388 = vmatprep.subr.bf16.mxu0 0
      %1389 = vmatpush1.bf16.msra.mxu0 %v1383
      %1390 = vmatprep.subr.bf16.mxu0 0
      %1391 = vmatpush1.bf16.msra.mxu0 0
      %1392 = vmatprep.subr.bf16.mxu0 0
      %1393 = vmatpush1.bf16.msra.mxu0 0
      %1394 = vmatprep.subr.bf16.mxu0 0
      %1395 = vmatpush1.bf16.msra.mxu0 0
      %1396 = vmatprep.subr.bf16.mxu0 0
      %1397 = vmatpush1.bf16.msra.mxu0 0
      %1398 = vmatprep.subr.bf16.mxu0 0
      %1399 = vmatpush1.bf16.msra.mxu0 0
      %1400 = vmatprep.subr.bf16.mxu0 0
      %1401 = vmatpush1.bf16.msra.mxu0 0
      %1402 = vmatprep.subr.bf16.mxu0 0
      %1403 = vmatpush1.bf16.msra.mxu0 0
      %1404 = vmatprep.subr.bf16.mxu0 0
      %1405 = vmatpush1.bf16.msra.mxu0 0
      %1406 = vmatprep.subr.bf16.mxu0 0
      %1407 = vmatpush1.bf16.msra.mxu0 0
      %1408 = vmatprep.subr.bf16.mxu0 0
      %1409 = vmatpush1.bf16.msra.mxu0 0
      %1410 = vmatprep.subr.bf16.mxu0 0
      %1411 = vmatpush1.bf16.msra.mxu0 0
      %1412 = vmatprep.subr.bf16.mxu0 0
      %1413 = vmatpush1.bf16.msra.mxu0 0
      %1414 = vmatprep.subr.bf16.mxu0 0
      %1415 = vmatpush1.bf16.msra.mxu0 0
      %1416 = vmatprep.subr.bf16.mxu0 0
      %1417 = vmatpush1.bf16.msra.mxu0 0
      %1418 = vmatprep.subr.bf16.mxu0 0
      %1419 = vmatpush1.bf16.msra.mxu0 0
      %1420 = vmatprep.mubr.bf16.mxu0 0
      %1421 = vmatmul.mubr.bf16.gmra.mrb[0].mxu0 %v1386
      %v1422 = vpop.f32.mrb[0].mxu0
      %v1423 = vadd.f32 0.0, %v1422
      %v1424 = vpop.f32.mrb[0].mxu0
      %v1425 = vpop.f32.mrb[0].mxu0
      %v1426 = vadd.f32 0.0, %v1425
      %v1427 = vpop.f32.mrb[0].mxu0
      %1428 = vdwg.mxu0
      %v1429 = vpack.c.bf16 %v1426, %v1423
      %v1430 = vmul.f32 %v1379, 0.25
      %v1431 = vmul.f32 %v1380, 0.25
      %1432 = vst.msk [vmem:[%s696] sm:$0xff] %vm972, %v1430
      %1433 = vst.msk [vmem:[%s696 + $0x8] sm:$0xff] %vm972, %v1431
      %1435 = vrot.lane.b32.xlu0 %v1173, 8
      %v1436 = vpop.permute.xlu0 %1435
      %1438 = vrot.lane.b32.xlu0 %v1301, 16
      %v1439 = vpop.permute.xlu0 %1438
      %1441 = vrot.lane.b32.xlu0 %v1429, 24
      %v1442 = vpop.permute.xlu0 %1441
      %v1445 = vsel %vm920, %v1042, %v1436
      %v1447 = vsel %vm972, %v1445, %v1439
      %vm1448 = vcmask 195584
      %v1450 = vsel %vm1448, %v1447, %v1442
      %v1451 = vld [vmem:[%s675] sm:$0xf]
      %v1452 = vld [vmem:[%s675 + $0x4] sm:$0xf]
      %v1453 = vld [vmem:[%s675 + $0x8] sm:$0xf]
      %v1454 = vld [vmem:[%s675 + $0xc] sm:$0xf]
      %v1455 = vld [vmem:[%s678] sm:$0x1]
      %v1457 = vlaneseq
      %v1458 = vshrl.u32 %v1457, 7
      %v1459 = vsub.s32 0, %v1458
      %v1460 = vrot.slane %v1455, %v1459
      %v1466 = vunpack.c.l.b16 %v1451
      %v1467 = vunpack.c.l.b16 %v1452
      %v1468 = vunpack.c.l.b16 %v1453
      %v1469 = vunpack.c.l.b16 %v1454
      %v1470 = vpack.c.b16 %v1467, %v1466
      %v1471 = vpack.c.b16 %v1469, %v1468
      %v1474 = vsel %vm730, %v1450, 0
      %1476 = vmatprep.subr.bf16.mxu0 0
      %1477 = vmatpush1.bf16.msra.mxu0 %v1470
      %1478 = vmatprep.subr.bf16.mxu0 0
      %1479 = vmatpush1.bf16.msra.mxu0 %v1471
      %1480 = vmatprep.subr.bf16.mxu0 0
      %1481 = vmatpush1.bf16.msra.mxu0 0
      %1482 = vmatprep.subr.bf16.mxu0 0
      %1483 = vmatpush1.bf16.msra.mxu0 0
      %1484 = vmatprep.subr.bf16.mxu0 0
      %1485 = vmatpush1.bf16.msra.mxu0 0
      %1486 = vmatprep.subr.bf16.mxu0 0
      %1487 = vmatpush1.bf16.msra.mxu0 0
      %1488 = vmatprep.subr.bf16.mxu0 0
      %1489 = vmatpush1.bf16.msra.mxu0 0
      %1490 = vmatprep.subr.bf16.mxu0 0
      %1491 = vmatpush1.bf16.msra.mxu0 0
      %1492 = vmatprep.subr.bf16.mxu0 0
      %1493 = vmatpush1.bf16.msra.mxu0 0
      %1494 = vmatprep.subr.bf16.mxu0 0
      %1495 = vmatpush1.bf16.msra.mxu0 0
      %1496 = vmatprep.subr.bf16.mxu0 0
      %1497 = vmatpush1.bf16.msra.mxu0 0
      %1498 = vmatprep.subr.bf16.mxu0 0
      %1499 = vmatpush1.bf16.msra.mxu0 0
      %1500 = vmatprep.subr.bf16.mxu0 0
      %1501 = vmatpush1.bf16.msra.mxu0 0
      %1502 = vmatprep.subr.bf16.mxu0 0
      %1503 = vmatpush1.bf16.msra.mxu0 0
      %1504 = vmatprep.subr.bf16.mxu0 0
      %1505 = vmatpush1.bf16.msra.mxu0 0
      %1506 = vmatprep.subr.bf16.mxu0 0
      %1507 = vmatpush1.bf16.msra.mxu0 0
      %1508 = vmatprep.mubr.bf16.mxu0 0
      %1509 = vmatmul.mubr.bf16.gmra.mrb[0].mxu0 %v1474
      %v1510 = vpop.f32.mrb[0].mxu0
      %v1511 = vadd.f32 %v1460, %v1510
      %v1512 = vpop.f32.mrb[0].mxu0
      %v1513 = vpop.f32.mrb[0].mxu0
      %v1514 = vadd.f32 %v1460, %v1513
      %v1515 = vpop.f32.mrb[0].mxu0
      %1516 = vdwg.mxu0
      %v1517 = vld [vmem:[%s10] sm:$0xf]
      %v1518 = vld [vmem:[%s10 + $0x4] sm:$0xf]
      %v1519 = vld [vmem:[%s10 + $0x8] sm:$0xf]
      %v1520 = vld [vmem:[%s10 + $0xc] sm:$0xf]
      %v1521 = vpack.c.bf16 %v1514, %v1511
      %v1522 = vld [vmem:[%s11] sm:$0xf]
      %v1523 = vld [vmem:[%s11 + $0x4] sm:$0xf]
      %v1524 = vld [vmem:[%s11 + $0x8] sm:$0xf]
      %v1525 = vld [vmem:[%s11 + $0xc] sm:$0xf]
      %v1530 = vunpack.c.l.b16 %v1522
      %v1531 = vunpack.c.l.b16 %v1523
      %v1532 = vunpack.c.l.b16 %v1524
      %v1533 = vunpack.c.l.b16 %v1525
      %v1534 = vpack.c.b16 %v1531, %v1530
      %v1535 = vpack.c.b16 %v1533, %v1532
      %v1539 = vsel %vm730, %v1521, 0
      %1541 = vmatprep.subr.bf16.mxu0 0
      %1542 = vmatpush1.bf16.msra.mxu0 %v1534
      %1543 = vmatprep.subr.bf16.mxu0 0
      %1544 = vmatpush1.bf16.msra.mxu0 %v1535
      %1545 = vmatprep.subr.bf16.mxu0 0
      %1546 = vmatpush1.bf16.msra.mxu0 0
      %1547 = vmatprep.subr.bf16.mxu0 0
      %1548 = vmatpush1.bf16.msra.mxu0 0
      %1549 = vmatprep.subr.bf16.mxu0 0
      %1550 = vmatpush1.bf16.msra.mxu0 0
      %1551 = vmatprep.subr.bf16.mxu0 0
      %1552 = vmatpush1.bf16.msra.mxu0 0
      %1553 = vmatprep.subr.bf16.mxu0 0
      %1554 = vmatpush1.bf16.msra.mxu0 0
      %1555 = vmatprep.subr.bf16.mxu0 0
      %1556 = vmatpush1.bf16.msra.mxu0 0
      %1557 = vmatprep.subr.bf16.mxu0 0
      %1558 = vmatpush1.bf16.msra.mxu0 0
      %1559 = vmatprep.subr.bf16.mxu0 0
      %1560 = vmatpush1.bf16.msra.mxu0 0
      %1561 = vmatprep.subr.bf16.mxu0 0
      %1562 = vmatpush1.bf16.msra.mxu0 0
      %1563 = vmatprep.subr.bf16.mxu0 0
      %1564 = vmatpush1.bf16.msra.mxu0 0
      %1565 = vmatprep.subr.bf16.mxu0 0
      %1566 = vmatpush1.bf16.msra.mxu0 0
      %1567 = vmatprep.subr.bf16.mxu0 0
      %1568 = vmatpush1.bf16.msra.mxu0 0
      %1569 = vmatprep.subr.bf16.mxu0 0
      %1570 = vmatpush1.bf16.msra.mxu0 0
      %1571 = vmatprep.subr.bf16.mxu0 0
      %1572 = vmatpush1.bf16.msra.mxu0 0
      %1573 = vmatprep.mubr.bf16.mxu0 0
      %1574 = vmatmul.mubr.bf16.gmra.mrb[0].mxu0 %v1539
      %v1575 = vpop.f32.mrb[0].mxu0
      %v1576 = vadd.f32 0.0, %v1575
      %v1577 = vpop.f32.mrb[0].mxu0
      %v1578 = vpop.f32.mrb[0].mxu0
      %v1579 = vadd.f32 0.0, %v1578
      %v1580 = vpop.f32.mrb[0].mxu0
      %1581 = vdwg.mxu0
      %v1586 = vunpack.c.l.b16 %v1517
      %v1587 = vunpack.c.l.b16 %v1518
      %v1588 = vunpack.c.l.b16 %v1519
      %v1589 = vunpack.c.l.b16 %v1520
      %v1590 = vpack.c.b16 %v1587, %v1586
      %v1591 = vpack.c.b16 %v1589, %v1588
      %1594 = vmatprep.subr.bf16.mxu0 0
      %1595 = vmatpush1.bf16.msra.mxu0 %v1590
      %1596 = vmatprep.subr.bf16.mxu0 0
      %1597 = vmatpush1.bf16.msra.mxu0 %v1591
      %1598 = vmatprep.subr.bf16.mxu0 0
      %1599 = vmatpush1.bf16.msra.mxu0 0
      %1600 = vmatprep.subr.bf16.mxu0 0
      %1601 = vmatpush1.bf16.msra.mxu0 0
      %1602 = vmatprep.subr.bf16.mxu0 0
      %1603 = vmatpush1.bf16.msra.mxu0 0
      %1604 = vmatprep.subr.bf16.mxu0 0
      %1605 = vmatpush1.bf16.msra.mxu0 0
      %1606 = vmatprep.subr.bf16.mxu0 0
      %1607 = vmatpush1.bf16.msra.mxu0 0
      %1608 = vmatprep.subr.bf16.mxu0 0
      %1609 = vmatpush1.bf16.msra.mxu0 0
      %1610 = vmatprep.subr.bf16.mxu0 0
      %1611 = vmatpush1.bf16.msra.mxu0 0
      %1612 = vmatprep.subr.bf16.mxu0 0
      %1613 = vmatpush1.bf16.msra.mxu0 0
      %1614 = vmatprep.subr.bf16.mxu0 0
      %1615 = vmatpush1.bf16.msra.mxu0 0
      %1616 = vmatprep.subr.bf16.mxu0 0
      %1617 = vmatpush1.bf16.msra.mxu0 0
      %1618 = vmatprep.subr.bf16.mxu0 0
      %1619 = vmatpush1.bf16.msra.mxu0 0
      %1620 = vmatprep.subr.bf16.mxu0 0
      %1621 = vmatpush1.bf16.msra.mxu0 0
      %1622 = vmatprep.subr.bf16.mxu0 0
      %1623 = vmatpush1.bf16.msra.mxu0 0
      %1624 = vmatprep.subr.bf16.mxu0 0
      %1625 = vmatpush1.bf16.msra.mxu0 0
      %1626 = vmatprep.mubr.bf16.mxu0 0
      %1627 = vmatmul.mubr.bf16.gmra.mrb[0].mxu0 %v732
      %v1628 = vpop.f32.mrb[0].mxu0
      %v1629 = vadd.f32 %v1576, %v1628
      %v1630 = vpop.f32.mrb[0].mxu0
      %v1631 = vpop.f32.mrb[0].mxu0
      %v1632 = vadd.f32 %v1579, %v1631
      %v1633 = vpop.f32.mrb[0].mxu0
      %1634 = vdwg.mxu0
      %v1635 = vld [vmem:[%s12] sm:$0x1]
      %v1637 = vlaneseq
      %v1638 = vshrl.u32 %v1637, 7
      %v1639 = vsub.s32 0, %v1638
      %v1640 = vrot.slane %v1635, %v1639
      %v1642 = vadd.f32 %v1629, %v1640
      %v1643 = vadd.f32 %v1632, %v1640
      %v1644 = vtanh.pop %v1642
      %v1645 = vtanh.pop %v1643
      %1646 = vst.msk [vmem:[%s687] sm:$0xff] %vm730, %v1644
      %1647 = vst.msk [vmem:[%s687 + $0x8] sm:$0xff] %vm730, %v1645
      %p1648 = scmp.lt.s32.totalorder %s30, 1
      %s1649 = scalar_select %p1648, %s30, 1
      %p1650 = scmp.lt.s32.totalorder %s31, 1
      %s1651 = scalar_select %p1650, %s31, 1
      %s1652 = smul.addr %s1651, 2
      %s1653 = smul.addr %s1649, 4
      %s1654 = sadd.s32 %s1652, %s1653
      %s1655 = smul.addr %s1654, 8
      %s1656 = scalar_lea.vmem %s13, %s1655
      %p1657 = scmp.lt.s32.totalorder %s30, 1
      %s1658 = scalar_select %p1657, %s30, 1
      %p1659 = scmp.lt.s32.totalorder %s31, 1
      %s1660 = scalar_select %p1659, %s31, 1
      %s1661 = smul.addr %s1660, 2
      %s1662 = smul.addr %s1658, 4
      %s1663 = sadd.s32 %s1661, %s1662
      %s1664 = smul.addr %s1663, 8
      %s1665 = scalar_lea.vmem %s14, %s1664
      // Predicated region
      $region73: #{temporal_cross_alignment.1} parent=71 // pred_check
        %p1666 = pneg %p385
      $region74: #{temporal_cross_alignment.1} parent=71 // pred_check_branch
        %1668 = sbr.rel (%p1666) target = $region76
      $region75: #{temporal_cross_alignment.1} parent=71 // pred_region
        _
      $region76: #{temporal_cross_alignment.1} parent=71 // pred_fallthru
        _
      // Predicated region
      $region77: #{temporal_cross_alignment.1} parent=71 // pred_check
        %p1669 = pneg %p413
      $region78: #{temporal_cross_alignment.1} parent=71 // pred_check_branch
        %1671 = sbr.rel (%p1669) target = $region80
      $region79: #{temporal_cross_alignment.1} parent=71 // pred_region
        _
      $region80: #{temporal_cross_alignment.1} parent=71 // pred_fallthru
        _
    $region72: #{temporal_cross_alignment.1} parent=5 // pred_fallthru
      _
    %p1672 = scmp.le.s32.totalorder 2, %s21
    // Predicated region
    $region81: #{temporal_cross_alignment.1} parent=5 // pred_check
      %p1673 = pneg %p1672
    $region82: #{temporal_cross_alignment.1} parent=5 // pred_check_branch
      %1675 = sbr.rel (%p1673) target = $region84
    $region83: #{temporal_cross_alignment.1} parent=5 // pred_region
      %s1676 = ssub.s32 %s21, 2
      // Predicated region
      $region85: #{temporal_cross_alignment.1} parent=83 // pred_check
        %p1677 = pneg %p391
      $region86: #{temporal_cross_alignment.1} parent=83 // pred_check_branch
        %1679 = sbr.rel (%p1677) target = $region88
      $region87: #{temporal_cross_alignment.1} parent=83 // pred_region
        %p1680 = scmp.lt.s32.totalorder %s32, 1
        %s1681 = scalar_select %p1680, %s32, 1
        %p1682 = scmp.lt.s32.totalorder %s33, 1
        %s1683 = scalar_select %p1682, %s33, 1
        %s1684 = smul.addr %s1683, 2
        %s1685 = smul.addr %s1681, 4
        %s1686 = sadd.s32 %s1684, %s1685
        %s1687 = smul.addr %s1686, 8
        %s1688 = scalar_lea.vmem %s13, %s1687
      $region88: #{temporal_cross_alignment.1} parent=83 // pred_fallthru
        _
      // Predicated region
      $region89: #{temporal_cross_alignment.1} parent=83 // pred_check
        %p1689 = pneg %p419
      $region90: #{temporal_cross_alignment.1} parent=83 // pred_check_branch
        %1691 = sbr.rel (%p1689) target = $region92
      $region91: #{temporal_cross_alignment.1} parent=83 // pred_region
        %p1692 = scmp.lt.s32.totalorder %s32, 1
        %s1693 = scalar_select %p1692, %s32, 1
        %p1694 = scmp.lt.s32.totalorder %s33, 1
        %s1695 = scalar_select %p1694, %s33, 1
        %s1696 = smul.addr %s1695, 2
        %s1697 = smul.addr %s1693, 4
        %s1698 = sadd.s32 %s1696, %s1697
        %s1699 = smul.addr %s1698, 8
        %s1700 = scalar_lea.vmem %s14, %s1699
      $region92: #{temporal_cross_alignment.1} parent=83 // pred_fallthru
        _
    $region84: #{temporal_cross_alignment.1} parent=5 // pred_fallthru
      _
  $region6: #{temporal_cross_alignment.1} parent=0 // loop_footer
    %s25 = sadd.s32 1, %s21
  $region7: #{temporal_cross_alignment.1} parent=0 // loop_footer_branch
    %20 = sbr.rel target = $region3
  $region8: #{temporal_cross_alignment.1} parent=0 // loop_exit
    _

</llo_original>
